<compile_context>
chip_gen: v6e
topology: v6e:2x2x1
jax: 0.10.0
libtpu: 0.0.40
codegen_flags: <defaults>
</compile_context>

<pallas_src>
import math
from functools import partial

import jax
import jax.numpy as jnp
from jax.experimental import pallas as pl
from jax.experimental.pallas import tpu as pltpu


def _attention_layer_kernel(q_ref, k_ref, v_ref,
                            wq_ref, bq_ref,
                            wk_ref, bk_ref,
                            wv_ref, bv_ref,
                            wo_ref, bo_ref,
                            o_ref,
                            qp_ref, kp_ref, vp_ref, ctx_ref,
                            *, n_heads, d_keys, d_values):
    f32 = jnp.float32
    bf16 = jnp.bfloat16

    # Full-width, lane-dense Q/K/V projections, once per batch tile.
    # (The 1/sqrt(d_keys) scale is already folded into wq/bq on the host.)
    qp_ref[...] = (jnp.einsum('bld,de->ble', q_ref[...], wq_ref[...],
                              preferred_element_type=f32)
                   + bq_ref[...]).astype(bf16)
    kp_ref[...] = (jnp.einsum('bsd,de->bse', k_ref[...], wk_ref[...],
                              preferred_element_type=f32)
                   + bk_ref[...]).astype(bf16)
    vp_ref[...] = (jnp.einsum('bsd,de->bse', v_ref[...], wv_ref[...],
                              preferred_element_type=f32)
                   + bv_ref[...]).astype(bf16)

    # Per-head softmax attention.  Static unroll -> static lane slices.
    for h in range(n_heads):
        ks = slice(h * d_keys, (h + 1) * d_keys)
        vs = slice(h * d_values, (h + 1) * d_values)
        q_h = qp_ref[:, :, ks]                       # (bt, L, dk) bf16
        k_h = kp_ref[:, :, ks]                       # (bt, S, dk) bf16
        v_h = vp_ref[:, :, vs]                       # (bt, S, dv) bf16

        s = jnp.einsum('ble,bse->bls', q_h, k_h,
                       preferred_element_type=f32)   # (bt, L, S) f32, pre-scaled
        s = s - jnp.max(s, axis=-1, keepdims=True)
        p = jnp.exp(s)
        denom = jnp.sum(p, axis=-1, keepdims=True)   # (bt, L, 1)

        ctx = jnp.einsum('bls,bsd->bld', p.astype(bf16), v_h,
                         preferred_element_type=f32)
        ctx = ctx * pl.reciprocal(denom, approx=True)      # normalize after PV
        ctx_ref[:, :, vs] = ctx.astype(bf16)               # static lane-slab store

    # Single full-depth output projection (K = H*d_values = d_model).
    o_ref[...] = (jnp.einsum('bld,de->ble', ctx_ref[...], wo_ref[...],
                             preferred_element_type=f32)
                  + bo_ref[...]).astype(o_ref.dtype)


def _vmem_limits():
    """(vmem_limit_bytes, tile budget) with a conservative v7x fallback."""
    try:
        cap = int(pltpu.get_tpu_info().vmem_capacity_bytes)
    except Exception:
        cap = 64 * 1024 * 1024        # v7x per-TensorCore VMEM
    limit = max(32 * 1024 * 1024, min(int(cap * 0.75), 96 * 1024 * 1024))
    budget = int(limit * 0.7)
    return limit, budget


def _footprint_bytes(bt, L, S, D, H, dk, dv):
    """Approximate per-grid-step VMEM footprint for batch tile `bt`."""
    in_bytes = 2 * bt * (L + 2 * S) * D * 2                   # bf16 inputs, 2x buffered
    out_bytes = 2 * bt * L * D * 4                            # f32 output, 2x buffered
    scratch = bt * (L * H * dk + S * H * dk + S * H * dv + L * H * dv) * 2
    scores = 3 * bt * L * S * 4                               # per-head f32 temporaries
    weights = 2 * (2 * D * H * dk + 2 * D * H * dv) + 4 * (2 * H * dk + H * dv + D)
    return in_bytes + out_bytes + scratch + scores + weights


def _pick_batch_tile(B, L, S, D, H, dk, dv, budget):
    """Largest divisor of B fitting the VMEM budget; keep >=2 parallel steps."""
    cap = B if B < 2 else max(1, B // 2)     # v7x: both TensorCores busy
    for cand in range(cap, 0, -1):
        if B % cand == 0 and _footprint_bytes(cand, L, S, D, H, dk, dv) <= budget:
            return cand
    return 1


def attention_layer_forward(queries, keys, values, params, *, n_heads,
                            attn_mask=None):
    """Pallas implementation of AttentionLayer.forward -> (out, attn=None)."""
    del attn_mask  # TODO(synk): FullAttention(mask_flag=False): mask unused.
    B, L, d_model = queries.shape
    _, S, _ = keys.shape
    wq, bq, wk, bk, wv, bv, wo, bo = params
    H = n_heads
    d_keys = wq.shape[0] // H
    d_values = wv.shape[0] // H
    bf16 = jnp.bfloat16
    f32 = jnp.float32
    scale = 1.0 / math.sqrt(d_keys)

    # Host-side (free) layout plumbing: bf16 inputs, pre-transposed bf16
    # weights, scale folded into the query projection.
    q_bf = queries.astype(bf16)
    k_bf = keys.astype(bf16)
    v_bf = values.astype(bf16)
    wq_t = (wq * scale).T.astype(bf16)            # (D, H*dk), scaled
    wk_t = wk.T.astype(bf16)                      # (D, H*dk)
    wv_t = wv.T.astype(bf16)                      # (D, H*dv)
    wo_t = wo.T.astype(bf16)                      # (H*dv, D)
    bq2 = (bq * scale).reshape(1, H * d_keys).astype(f32)
    bk2 = bk.reshape(1, H * d_keys).astype(f32)
    bv2 = bv.reshape(1, H * d_values).astype(f32)
    bo2 = bo.reshape(1, d_model).astype(f32)

    vmem_limit, budget = _vmem_limits()
    bt = _pick_batch_tile(B, L, S, d_model, H, d_keys, d_values, budget)
    grid = (B // bt,)

    kernel = partial(_attention_layer_kernel, n_heads=H,
                     d_keys=d_keys, d_values=d_values)

    cost = pl.CostEstimate(
        flops=2 * B * (L * d_model * H * d_keys
                       + S * d_model * H * d_keys
                       + S * d_model * H * d_values
                       + H * L * S * d_keys
                       + H * L * S * d_values
                       + L * H * d_values * d_model),
        transcendentals=B * H * L * S,
        bytes_accessed=(2 * (B * L * d_model + 2 * B * S * d_model)      # bf16 in
                        + 2 * (2 * d_model * H * d_keys
                               + 2 * d_model * H * d_values)             # bf16 weights
                        + 4 * (2 * H * d_keys + H * d_values + d_model)  # biases
                        + 4 * B * L * d_model),                          # f32 out
    )

    out = pl.pallas_call(
        kernel,
        out_shape=jax.ShapeDtypeStruct((B, L, d_model), f32),
        grid=grid,
        in_specs=[
            pl.BlockSpec((bt, L, d_model), lambda b: (b, 0, 0)),   # queries
            pl.BlockSpec((bt, S, d_model), lambda b: (b, 0, 0)),   # keys
            pl.BlockSpec((bt, S, d_model), lambda b: (b, 0, 0)),   # values
            pl.BlockSpec((d_model, H * d_keys),   lambda b: (0, 0)),  # Wq^T (scaled)
            pl.BlockSpec((1, H * d_keys),         lambda b: (0, 0)),  # bq (scaled)
            pl.BlockSpec((d_model, H * d_keys),   lambda b: (0, 0)),  # Wk^T
            pl.BlockSpec((1, H * d_keys),         lambda b: (0, 0)),  # bk
            pl.BlockSpec((d_model, H * d_values), lambda b: (0, 0)),  # Wv^T
            pl.BlockSpec((1, H * d_values),       lambda b: (0, 0)),  # bv
            pl.BlockSpec((H * d_values, d_model), lambda b: (0, 0)),  # Wo^T
            pl.BlockSpec((1, d_model),            lambda b: (0, 0)),  # bo
        ],
        out_specs=pl.BlockSpec((bt, L, d_model), lambda b: (b, 0, 0)),
        scratch_shapes=[
            pltpu.VMEM((bt, L, H * d_keys), bf16),     # Q projection
            pltpu.VMEM((bt, S, H * d_keys), bf16),     # K projection
            pltpu.VMEM((bt, S, H * d_values), bf16),   # V projection
            pltpu.VMEM((bt, L, H * d_values), bf16),   # per-head context slab
        ],
        compiler_params=pltpu.CompilerParams(
            dimension_semantics=("parallel",),
            vmem_limit_bytes=vmem_limit),
        cost_estimate=cost,
    )(q_bf, k_bf, v_bf, wq_t, bq2, wk_t, bk2, wv_t, bv2, wo_t, bo2)

    return out, None  # output_attention=False -> attn is None


def _reference_forward(queries, keys, values, params, *, n_heads):
    """Pure-JAX f32 reference (mirrors the PyTorch module with FullAttention)."""
    wq, bq, wk, bk, wv, bv, wo, bo = params
    B, L, _ = queries.shape
    _, S, _ = keys.shape
    H = n_heads
    Q = (queries @ wq.T + bq).reshape(B, L, H, -1)
    K = (keys @ wk.T + bk).reshape(B, S, H, -1)
    V = (values @ wv.T + bv).reshape(B, S, H, -1)
    E = Q.shape[-1]
    scores = jnp.einsum("blhe,bshe->bhls", Q, K) / math.sqrt(E)
    A = jax.nn.softmax(scores, axis=-1)
    out = jnp.einsum("bhls,bshd->blhd", A, V).reshape(B, L, -1)
    return out @ wo.T + bo


def _reference_forward_bf16(queries, keys, values, params, *, n_heads):
    """Reference mirroring the kernel's bf16-operand / f32-accum strategy."""
    wq, bq, wk, bk, wv, bv, wo, bo = params
    B, L, _ = queries.shape
    _, S, _ = keys.shape
    H = n_heads
    dk = wq.shape[0] // H
    dv = wv.shape[0] // H
    scale = 1.0 / math.sqrt(dk)
    bf, f32 = jnp.bfloat16, jnp.float32
    qb, kb, vb = (x.astype(bf) for x in (queries, keys, values))
    Q = (jnp.dot(qb, (wq * scale).T.astype(bf), preferred_element_type=f32)
         + bq * scale).astype(bf).reshape(B, L, H, dk)
    K = (jnp.dot(kb, wk.T.astype(bf), preferred_element_type=f32)
         + bk).astype(bf).reshape(B, S, H, dk)
    V = (jnp.dot(vb, wv.T.astype(bf), preferred_element_type=f32)
         + bv).astype(bf).reshape(B, S, H, dv)
    s = jnp.einsum("blhe,bshe->bhls", Q, K, preferred_element_type=f32)
    s = s - s.max(-1, keepdims=True)
    p = jnp.exp(s)
    denom = jnp.moveaxis(p.sum(-1, keepdims=True), 1, 2)     # (B, L, H, 1)
    ctx = jnp.einsum("bhls,bshd->blhd", p.astype(bf), V,
                     preferred_element_type=f32) / denom
    ctx = ctx.astype(bf).reshape(B, L, H * dv)
    return jnp.dot(ctx, wo.T.astype(bf), preferred_element_type=f32) + bo


def _init_params(key, d_model, n_heads):
    d_keys = d_model // n_heads
    d_values = d_model // n_heads
    ks = jax.random.split(key, 8)

    def lin(kw, kb, out_f, in_f):
        bound = 1.0 / math.sqrt(in_f)
        w = jax.random.uniform(kw, (out_f, in_f), jnp.float32, -bound, bound)
        b = jax.random.uniform(kb, (out_f,), jnp.float32, -bound, bound)
        return w, b

    wq, bq = lin(ks[0], ks[1], d_keys * n_heads, d_model)
    wk, bk = lin(ks[2], ks[3], d_keys * n_heads, d_model)
    wv, bv = lin(ks[4], ks[5], d_values * n_heads, d_model)
    wo, bo = lin(ks[6], ks[7], d_model, d_values * n_heads)
    return (wq, bq, wk, bk, wv, bv, wo, bo)


if __name__ == "__main__":
    B, L, S, d_model, n_heads = 2, 8, 8, 32, 4

    key = jax.random.PRNGKey(0)
    kq, kk, kv, kp = jax.random.split(key, 4)
    queries = jax.random.normal(kq, (B, L, d_model), jnp.float32)
    keys_in = jax.random.normal(kk, (B, S, d_model), jnp.float32)
    values = jax.random.normal(kv, (B, S, d_model), jnp.float32)
    params = _init_params(kp, d_model, n_heads)

    out, attn = attention_layer_forward(queries, keys_in, values, params,
                                        n_heads=n_heads)
    out = jax.block_until_ready(out)

    assert out.shape == (B, L, d_model)
    assert attn is None

    # Tight check against a reference using the same bf16-MXU / f32-accum math.
    ref_bf16 = _reference_forward_bf16(queries, keys_in, values, params,
                                       n_heads=n_heads)
    assert jnp.allclose(out, ref_bf16, atol=2e-2, rtol=2e-2), \
        "mismatch vs bf16-matched JAX reference"

    # Looser check against the exact f32 module semantics (bf16 approximation).
    ref_f32 = _reference_forward(queries, keys_in, values, params,
                                 n_heads=n_heads)
    assert jnp.allclose(out, ref_f32, atol=6e-2, rtol=6e-2), \
        "mismatch vs f32 JAX reference"

    print("KERNEL_OK")
</pallas_src>

<mosaic_0001>
module attributes {stable_mosaic.version = 11 : i64} {
  func.func @_attention_layer_kernel(%arg0: i32, %arg1: memref<1x8x32xbf16, #tpu.memory_space<vmem>>, %arg2: memref<1x8x32xbf16, #tpu.memory_space<vmem>>, %arg3: memref<1x8x32xbf16, #tpu.memory_space<vmem>>, %arg4: memref<32x32xbf16, #tpu.memory_space<vmem>>, %arg5: memref<1x32xf32, #tpu.memory_space<vmem>>, %arg6: memref<32x32xbf16, #tpu.memory_space<vmem>>, %arg7: memref<1x32xf32, #tpu.memory_space<vmem>>, %arg8: memref<32x32xbf16, #tpu.memory_space<vmem>>, %arg9: memref<1x32xf32, #tpu.memory_space<vmem>>, %arg10: memref<32x32xbf16, #tpu.memory_space<vmem>>, %arg11: memref<1x32xf32, #tpu.memory_space<vmem>>, %arg12: memref<1x8x32xf32, #tpu.memory_space<vmem>>, %arg13: memref<1x8x32xbf16, #tpu.memory_space<vmem>>, %arg14: memref<1x8x32xbf16, #tpu.memory_space<vmem>>, %arg15: memref<1x8x32xbf16, #tpu.memory_space<vmem>>, %arg16: memref<1x8x32xbf16, #tpu.memory_space<vmem>>) attributes {dimension_semantics = [#tpu.dimension_semantics<parallel>], iteration_bounds = array<i64: 2>, scalar_prefetch = 0 : i64, scratch_operands = 4 : i64, tpu.core_type = #tpu.core_type<tc>, window_params = [{transform_indices = @transform_0, window_bounds = array<i64: 1, 8, 32>}, {transform_indices = @transform_1, window_bounds = array<i64: 1, 8, 32>}, {transform_indices = @transform_2, window_bounds = array<i64: 1, 8, 32>}, {pipeline_mode = #tpu.pipeline_mode<synchronous>, transform_indices = @transform_3, window_bounds = array<i64: 32, 32>}, {pipeline_mode = #tpu.pipeline_mode<synchronous>, transform_indices = @transform_4, window_bounds = array<i64: 1, 32>}, {pipeline_mode = #tpu.pipeline_mode<synchronous>, transform_indices = @transform_5, window_bounds = array<i64: 32, 32>}, {pipeline_mode = #tpu.pipeline_mode<synchronous>, transform_indices = @transform_6, window_bounds = array<i64: 1, 32>}, {pipeline_mode = #tpu.pipeline_mode<synchronous>, transform_indices = @transform_7, window_bounds = array<i64: 32, 32>}, {pipeline_mode = #tpu.pipeline_mode<synchronous>, transform_indices = @transform_8, window_bounds = array<i64: 1, 32>}, {pipeline_mode = #tpu.pipeline_mode<synchronous>, transform_indices = @transform_9, window_bounds = array<i64: 32, 32>}, {pipeline_mode = #tpu.pipeline_mode<synchronous>, transform_indices = @transform_10, window_bounds = array<i64: 1, 32>}, {transform_indices = @transform_11, window_bounds = array<i64: 1, 8, 32>}]} {
    %c0 = arith.constant 0 : index
    %c0_0 = arith.constant 0 : index
    %c0_1 = arith.constant 0 : index
    %0 = vector.load %arg1[%c0, %c0_0, %c0_1] : memref<1x8x32xbf16, #tpu.memory_space<vmem>>, vector<1x8x32xbf16>
    %c0_2 = arith.constant 0 : index
    %c0_3 = arith.constant 0 : index
    %1 = vector.load %arg4[%c0_2, %c0_3] : memref<32x32xbf16, #tpu.memory_space<vmem>>, vector<32x32xbf16>
    "tpu.trace_start"() <{level = 10 : i32, message = "bld,de->ble"}> : () -> ()
    %cst = arith.constant dense<0.000000e+00> : vector<1x8x32xf32>
    %2 = tpu.matmul %0, %1, %cst {dimension_numbers = #tpu.dot_dimension_numbers<[2], [0], [0, 1], [1], [0, 0, 0, 1, 1, 1], [], []>} : vector<1x8x32xbf16>, vector<32x32xbf16>, vector<1x8x32xf32> -> vector<1x8x32xf32>
    "tpu.trace_stop"() : () -> ()
    %c0_4 = arith.constant 0 : index
    %c0_5 = arith.constant 0 : index
    %3 = vector.load %arg5[%c0_4, %c0_5] : memref<1x32xf32, #tpu.memory_space<vmem>>, vector<1x32xf32>
    %4 = vector.shape_cast %3 : vector<1x32xf32> to vector<1x1x32xf32>
    %5 = vector.broadcast %4 : vector<1x1x32xf32> to vector<1x8x32xf32>
    %6 = arith.addf %2, %5 : vector<1x8x32xf32>
    %7 = arith.truncf %6 : vector<1x8x32xf32> to vector<1x8x32xbf16>
    %c0_6 = arith.constant 0 : index
    %c0_7 = arith.constant 0 : index
    %c0_8 = arith.constant 0 : index
    %8 = vector.load %arg13[%c0_6, %c0_7, %c0_8] : memref<1x8x32xbf16, #tpu.memory_space<vmem>>, vector<1x8x32xbf16>
    tpu.vector_store %arg13[%c0_6, %c0_7, %c0_8], %7 {strides = array<i32>} : memref<1x8x32xbf16, #tpu.memory_space<vmem>>, vector<1x8x32xbf16>,
    %c0_9 = arith.constant 0 : index
    %c0_10 = arith.constant 0 : index
    %c0_11 = arith.constant 0 : index
    %9 = vector.load %arg2[%c0_9, %c0_10, %c0_11] : memref<1x8x32xbf16, #tpu.memory_space<vmem>>, vector<1x8x32xbf16>
    %c0_12 = arith.constant 0 : index
    %c0_13 = arith.constant 0 : index
    %10 = vector.load %arg6[%c0_12, %c0_13] : memref<32x32xbf16, #tpu.memory_space<vmem>>, vector<32x32xbf16>
    "tpu.trace_start"() <{level = 10 : i32, message = "bsd,de->bse"}> : () -> ()
    %cst_14 = arith.constant dense<0.000000e+00> : vector<1x8x32xf32>
    %11 = tpu.matmul %9, %10, %cst_14 {dimension_numbers = #tpu.dot_dimension_numbers<[2], [0], [0, 1], [1], [0, 0, 0, 1, 1, 1], [], []>} : vector<1x8x32xbf16>, vector<32x32xbf16>, vector<1x8x32xf32> -> vector<1x8x32xf32>
    "tpu.trace_stop"() : () -> ()
    %c0_15 = arith.constant 0 : index
    %c0_16 = arith.constant 0 : index
    %12 = vector.load %arg7[%c0_15, %c0_16] : memref<1x32xf32, #tpu.memory_space<vmem>>, vector<1x32xf32>
    %13 = vector.shape_cast %12 : vector<1x32xf32> to vector<1x1x32xf32>
    %14 = vector.broadcast %13 : vector<1x1x32xf32> to vector<1x8x32xf32>
    %15 = arith.addf %11, %14 : vector<1x8x32xf32>
    %16 = arith.truncf %15 : vector<1x8x32xf32> to vector<1x8x32xbf16>
    %c0_17 = arith.constant 0 : index
    %c0_18 = arith.constant 0 : index
    %c0_19 = arith.constant 0 : index
    %17 = vector.load %arg14[%c0_17, %c0_18, %c0_19] : memref<1x8x32xbf16, #tpu.memory_space<vmem>>, vector<1x8x32xbf16>
    tpu.vector_store %arg14[%c0_17, %c0_18, %c0_19], %16 {strides = array<i32>} : memref<1x8x32xbf16, #tpu.memory_space<vmem>>, vector<1x8x32xbf16>,
    %c0_20 = arith.constant 0 : index
    %c0_21 = arith.constant 0 : index
    %c0_22 = arith.constant 0 : index
    %18 = vector.load %arg3[%c0_20, %c0_21, %c0_22] : memref<1x8x32xbf16, #tpu.memory_space<vmem>>, vector<1x8x32xbf16>
    %c0_23 = arith.constant 0 : index
    %c0_24 = arith.constant 0 : index
    %19 = vector.load %arg8[%c0_23, %c0_24] : memref<32x32xbf16, #tpu.memory_space<vmem>>, vector<32x32xbf16>
    "tpu.trace_start"() <{level = 10 : i32, message = "bsd,de->bse"}> : () -> ()
    %cst_25 = arith.constant dense<0.000000e+00> : vector<1x8x32xf32>
    %20 = tpu.matmul %18, %19, %cst_25 {dimension_numbers = #tpu.dot_dimension_numbers<[2], [0], [0, 1], [1], [0, 0, 0, 1, 1, 1], [], []>} : vector<1x8x32xbf16>, vector<32x32xbf16>, vector<1x8x32xf32> -> vector<1x8x32xf32>
    "tpu.trace_stop"() : () -> ()
    %c0_26 = arith.constant 0 : index
    %c0_27 = arith.constant 0 : index
    %21 = vector.load %arg9[%c0_26, %c0_27] : memref<1x32xf32, #tpu.memory_space<vmem>>, vector<1x32xf32>
    %22 = vector.shape_cast %21 : vector<1x32xf32> to vector<1x1x32xf32>
    %23 = vector.broadcast %22 : vector<1x1x32xf32> to vector<1x8x32xf32>
    %24 = arith.addf %20, %23 : vector<1x8x32xf32>
    %25 = arith.truncf %24 : vector<1x8x32xf32> to vector<1x8x32xbf16>
    %c0_28 = arith.constant 0 : index
    %c0_29 = arith.constant 0 : index
    %c0_30 = arith.constant 0 : index
    %26 = vector.load %arg15[%c0_28, %c0_29, %c0_30] : memref<1x8x32xbf16, #tpu.memory_space<vmem>>, vector<1x8x32xbf16>
    tpu.vector_store %arg15[%c0_28, %c0_29, %c0_30], %25 {strides = array<i32>} : memref<1x8x32xbf16, #tpu.memory_space<vmem>>, vector<1x8x32xbf16>,
    %c0_31 = arith.constant 0 : index
    %c0_32 = arith.constant 0 : index
    %c0_33 = arith.constant 0 : index
    %27 = vector.load %arg13[%c0_31, %c0_32, %c0_33] : memref<1x8x32xbf16, #tpu.memory_space<vmem>>, vector<1x8x8xbf16>
    %c0_34 = arith.constant 0 : index
    %c0_35 = arith.constant 0 : index
    %c0_36 = arith.constant 0 : index
    %28 = vector.load %arg14[%c0_34, %c0_35, %c0_36] : memref<1x8x32xbf16, #tpu.memory_space<vmem>>, vector<1x8x8xbf16>
    %c0_37 = arith.constant 0 : index
    %c0_38 = arith.constant 0 : index
    %c0_39 = arith.constant 0 : index
    %29 = vector.load %arg15[%c0_37, %c0_38, %c0_39] : memref<1x8x32xbf16, #tpu.memory_space<vmem>>, vector<1x8x8xbf16>
    "tpu.trace_start"() <{level = 10 : i32, message = "ble,bse->bls"}> : () -> ()
    %cst_40 = arith.constant dense<0.000000e+00> : vector<1x8x8xf32>
    %30 = tpu.matmul %27, %28, %cst_40 {dimension_numbers = #tpu.dot_dimension_numbers<[2], [2], [1], [1], [0, 0, 0, 1, 1, 1], [0], [0]>} : vector<1x8x8xbf16>, vector<1x8x8xbf16>, vector<1x8x8xf32> -> vector<1x8x8xf32>
    "tpu.trace_stop"() : () -> ()
    %cst_41 = arith.constant dense<0xFF800000> : vector<1x8xf32>
    %31 = vector.multi_reduction <maximumf>, %30, %cst_41 [2] : vector<1x8x8xf32> to vector<1x8xf32>
    %32 = vector.shape_cast %31 : vector<1x8xf32> to vector<1x8x1xf32>
    %33 = vector.broadcast %32 : vector<1x8x1xf32> to vector<1x8x8xf32>
    %34 = arith.subf %30, %33 : vector<1x8x8xf32>
    %35 = math.exp %34 : vector<1x8x8xf32>
    %cst_42 = arith.constant dense<0.000000e+00> : vector<1x8xf32>
    %36 = vector.multi_reduction <add>, %35, %cst_42 [2] : vector<1x8x8xf32> to vector<1x8xf32>
    %37 = vector.shape_cast %36 : vector<1x8xf32> to vector<1x8x1xf32>
    %38 = arith.truncf %35 : vector<1x8x8xf32> to vector<1x8x8xbf16>
    "tpu.trace_start"() <{level = 10 : i32, message = "bls,bsd->bld"}> : () -> ()
    %cst_43 = arith.constant dense<0.000000e+00> : vector<1x8x8xf32>
    %39 = tpu.matmul %38, %29, %cst_43 {dimension_numbers = #tpu.dot_dimension_numbers<[2], [1], [1], [2], [0, 0, 0, 1, 1, 2], [0], [0]>} : vector<1x8x8xbf16>, vector<1x8x8xbf16>, vector<1x8x8xf32> -> vector<1x8x8xf32>
    "tpu.trace_stop"() : () -> ()
    %40 = tpu.reciprocal %37 {approx = true} : vector<1x8x1xf32> -> vector<1x8x1xf32>
    %41 = vector.broadcast %40 : vector<1x8x1xf32> to vector<1x8x8xf32>
    %42 = arith.mulf %39, %41 : vector<1x8x8xf32>
    %43 = arith.truncf %42 : vector<1x8x8xf32> to vector<1x8x8xbf16>
    %c0_44 = arith.constant 0 : index
    %c0_45 = arith.constant 0 : index
    %c0_46 = arith.constant 0 : index
    %44 = vector.load %arg16[%c0_44, %c0_45, %c0_46] : memref<1x8x32xbf16, #tpu.memory_space<vmem>>, vector<1x8x8xbf16>
    tpu.vector_store %arg16[%c0_44, %c0_45, %c0_46], %43 {strides = array<i32>} : memref<1x8x32xbf16, #tpu.memory_space<vmem>>, vector<1x8x8xbf16>,
    %c0_47 = arith.constant 0 : index
    %c0_48 = arith.constant 0 : index
    %c8 = arith.constant 8 : index
    %45 = vector.load %arg13[%c0_47, %c0_48, %c8] : memref<1x8x32xbf16, #tpu.memory_space<vmem>>, vector<1x8x8xbf16>
    %c0_49 = arith.constant 0 : index
    %c0_50 = arith.constant 0 : index
    %c8_51 = arith.constant 8 : index
    %46 = vector.load %arg14[%c0_49, %c0_50, %c8_51] : memref<1x8x32xbf16, #tpu.memory_space<vmem>>, vector<1x8x8xbf16>
    %c0_52 = arith.constant 0 : index
    %c0_53 = arith.constant 0 : index
    %c8_54 = arith.constant 8 : index
    %47 = vector.load %arg15[%c0_52, %c0_53, %c8_54] : memref<1x8x32xbf16, #tpu.memory_space<vmem>>, vector<1x8x8xbf16>
    "tpu.trace_start"() <{level = 10 : i32, message = "ble,bse->bls"}> : () -> ()
    %cst_55 = arith.constant dense<0.000000e+00> : vector<1x8x8xf32>
    %48 = tpu.matmul %45, %46, %cst_55 {dimension_numbers = #tpu.dot_dimension_numbers<[2], [2], [1], [1], [0, 0, 0, 1, 1, 1], [0], [0]>} : vector<1x8x8xbf16>, vector<1x8x8xbf16>, vector<1x8x8xf32> -> vector<1x8x8xf32>
    "tpu.trace_stop"() : () -> ()
    %cst_56 = arith.constant dense<0xFF800000> : vector<1x8xf32>
    %49 = vector.multi_reduction <maximumf>, %48, %cst_56 [2] : vector<1x8x8xf32> to vector<1x8xf32>
    %50 = vector.shape_cast %49 : vector<1x8xf32> to vector<1x8x1xf32>
    %51 = vector.broadcast %50 : vector<1x8x1xf32> to vector<1x8x8xf32>
    %52 = arith.subf %48, %51 : vector<1x8x8xf32>
    %53 = math.exp %52 : vector<1x8x8xf32>
    %cst_57 = arith.constant dense<0.000000e+00> : vector<1x8xf32>
    %54 = vector.multi_reduction <add>, %53, %cst_57 [2] : vector<1x8x8xf32> to vector<1x8xf32>
    %55 = vector.shape_cast %54 : vector<1x8xf32> to vector<1x8x1xf32>
    %56 = arith.truncf %53 : vector<1x8x8xf32> to vector<1x8x8xbf16>
    "tpu.trace_start"() <{level = 10 : i32, message = "bls,bsd->bld"}> : () -> ()
    %cst_58 = arith.constant dense<0.000000e+00> : vector<1x8x8xf32>
    %57 = tpu.matmul %56, %47, %cst_58 {dimension_numbers = #tpu.dot_dimension_numbers<[2], [1], [1], [2], [0, 0, 0, 1, 1, 2], [0], [0]>} : vector<1x8x8xbf16>, vector<1x8x8xbf16>, vector<1x8x8xf32> -> vector<1x8x8xf32>
    "tpu.trace_stop"() : () -> ()
    %58 = tpu.reciprocal %55 {approx = true} : vector<1x8x1xf32> -> vector<1x8x1xf32>
    %59 = vector.broadcast %58 : vector<1x8x1xf32> to vector<1x8x8xf32>
    %60 = arith.mulf %57, %59 : vector<1x8x8xf32>
    %61 = arith.truncf %60 : vector<1x8x8xf32> to vector<1x8x8xbf16>
    %c0_59 = arith.constant 0 : index
    %c0_60 = arith.constant 0 : index
    %c8_61 = arith.constant 8 : index
    %62 = vector.load %arg16[%c0_59, %c0_60, %c8_61] : memref<1x8x32xbf16, #tpu.memory_space<vmem>>, vector<1x8x8xbf16>
    tpu.vector_store %arg16[%c0_59, %c0_60, %c8_61], %61 {strides = array<i32>} : memref<1x8x32xbf16, #tpu.memory_space<vmem>>, vector<1x8x8xbf16>,
    %c0_62 = arith.constant 0 : index
    %c0_63 = arith.constant 0 : index
    %c16 = arith.constant 16 : index
    %63 = vector.load %arg13[%c0_62, %c0_63, %c16] : memref<1x8x32xbf16, #tpu.memory_space<vmem>>, vector<1x8x8xbf16>
    %c0_64 = arith.constant 0 : index
    %c0_65 = arith.constant 0 : index
    %c16_66 = arith.constant 16 : index
    %64 = vector.load %arg14[%c0_64, %c0_65, %c16_66] : memref<1x8x32xbf16, #tpu.memory_space<vmem>>, vector<1x8x8xbf16>
    %c0_67 = arith.constant 0 : index
    %c0_68 = arith.constant 0 : index
    %c16_69 = arith.constant 16 : index
    %65 = vector.load %arg15[%c0_67, %c0_68, %c16_69] : memref<1x8x32xbf16, #tpu.memory_space<vmem>>, vector<1x8x8xbf16>
    "tpu.trace_start"() <{level = 10 : i32, message = "ble,bse->bls"}> : () -> ()
    %cst_70 = arith.constant dense<0.000000e+00> : vector<1x8x8xf32>
    %66 = tpu.matmul %63, %64, %cst_70 {dimension_numbers = #tpu.dot_dimension_numbers<[2], [2], [1], [1], [0, 0, 0, 1, 1, 1], [0], [0]>} : vector<1x8x8xbf16>, vector<1x8x8xbf16>, vector<1x8x8xf32> -> vector<1x8x8xf32>
    "tpu.trace_stop"() : () -> ()
    %cst_71 = arith.constant dense<0xFF800000> : vector<1x8xf32>
    %67 = vector.multi_reduction <maximumf>, %66, %cst_71 [2] : vector<1x8x8xf32> to vector<1x8xf32>
    %68 = vector.shape_cast %67 : vector<1x8xf32> to vector<1x8x1xf32>
    %69 = vector.broadcast %68 : vector<1x8x1xf32> to vector<1x8x8xf32>
    %70 = arith.subf %66, %69 : vector<1x8x8xf32>
    %71 = math.exp %70 : vector<1x8x8xf32>
    %cst_72 = arith.constant dense<0.000000e+00> : vector<1x8xf32>
    %72 = vector.multi_reduction <add>, %71, %cst_72 [2] : vector<1x8x8xf32> to vector<1x8xf32>
    %73 = vector.shape_cast %72 : vector<1x8xf32> to vector<1x8x1xf32>
    %74 = arith.truncf %71 : vector<1x8x8xf32> to vector<1x8x8xbf16>
    "tpu.trace_start"() <{level = 10 : i32, message = "bls,bsd->bld"}> : () -> ()
    %cst_73 = arith.constant dense<0.000000e+00> : vector<1x8x8xf32>
    %75 = tpu.matmul %74, %65, %cst_73 {dimension_numbers = #tpu.dot_dimension_numbers<[2], [1], [1], [2], [0, 0, 0, 1, 1, 2], [0], [0]>} : vector<1x8x8xbf16>, vector<1x8x8xbf16>, vector<1x8x8xf32> -> vector<1x8x8xf32>
    "tpu.trace_stop"() : () -> ()
    %76 = tpu.reciprocal %73 {approx = true} : vector<1x8x1xf32> -> vector<1x8x1xf32>
    %77 = vector.broadcast %76 : vector<1x8x1xf32> to vector<1x8x8xf32>
    %78 = arith.mulf %75, %77 : vector<1x8x8xf32>
    %79 = arith.truncf %78 : vector<1x8x8xf32> to vector<1x8x8xbf16>
    %c0_74 = arith.constant 0 : index
    %c0_75 = arith.constant 0 : index
    %c16_76 = arith.constant 16 : index
    %80 = vector.load %arg16[%c0_74, %c0_75, %c16_76] : memref<1x8x32xbf16, #tpu.memory_space<vmem>>, vector<1x8x8xbf16>
    tpu.vector_store %arg16[%c0_74, %c0_75, %c16_76], %79 {strides = array<i32>} : memref<1x8x32xbf16, #tpu.memory_space<vmem>>, vector<1x8x8xbf16>,
    %c0_77 = arith.constant 0 : index
    %c0_78 = arith.constant 0 : index
    %c24 = arith.constant 24 : index
    %81 = vector.load %arg13[%c0_77, %c0_78, %c24] : memref<1x8x32xbf16, #tpu.memory_space<vmem>>, vector<1x8x8xbf16>
    %c0_79 = arith.constant 0 : index
    %c0_80 = arith.constant 0 : index
    %c24_81 = arith.constant 24 : index
    %82 = vector.load %arg14[%c0_79, %c0_80, %c24_81] : memref<1x8x32xbf16, #tpu.memory_space<vmem>>, vector<1x8x8xbf16>
    %c0_82 = arith.constant 0 : index
    %c0_83 = arith.constant 0 : index
    %c24_84 = arith.constant 24 : index
    %83 = vector.load %arg15[%c0_82, %c0_83, %c24_84] : memref<1x8x32xbf16, #tpu.memory_space<vmem>>, vector<1x8x8xbf16>
    "tpu.trace_start"() <{level = 10 : i32, message = "ble,bse->bls"}> : () -> ()
    %cst_85 = arith.constant dense<0.000000e+00> : vector<1x8x8xf32>
    %84 = tpu.matmul %81, %82, %cst_85 {dimension_numbers = #tpu.dot_dimension_numbers<[2], [2], [1], [1], [0, 0, 0, 1, 1, 1], [0], [0]>} : vector<1x8x8xbf16>, vector<1x8x8xbf16>, vector<1x8x8xf32> -> vector<1x8x8xf32>
    "tpu.trace_stop"() : () -> ()
    %cst_86 = arith.constant dense<0xFF800000> : vector<1x8xf32>
    %85 = vector.multi_reduction <maximumf>, %84, %cst_86 [2] : vector<1x8x8xf32> to vector<1x8xf32>
    %86 = vector.shape_cast %85 : vector<1x8xf32> to vector<1x8x1xf32>
    %87 = vector.broadcast %86 : vector<1x8x1xf32> to vector<1x8x8xf32>
    %88 = arith.subf %84, %87 : vector<1x8x8xf32>
    %89 = math.exp %88 : vector<1x8x8xf32>
    %cst_87 = arith.constant dense<0.000000e+00> : vector<1x8xf32>
    %90 = vector.multi_reduction <add>, %89, %cst_87 [2] : vector<1x8x8xf32> to vector<1x8xf32>
    %91 = vector.shape_cast %90 : vector<1x8xf32> to vector<1x8x1xf32>
    %92 = arith.truncf %89 : vector<1x8x8xf32> to vector<1x8x8xbf16>
    "tpu.trace_start"() <{level = 10 : i32, message = "bls,bsd->bld"}> : () -> ()
    %cst_88 = arith.constant dense<0.000000e+00> : vector<1x8x8xf32>
    %93 = tpu.matmul %92, %83, %cst_88 {dimension_numbers = #tpu.dot_dimension_numbers<[2], [1], [1], [2], [0, 0, 0, 1, 1, 2], [0], [0]>} : vector<1x8x8xbf16>, vector<1x8x8xbf16>, vector<1x8x8xf32> -> vector<1x8x8xf32>
    "tpu.trace_stop"() : () -> ()
    %94 = tpu.reciprocal %91 {approx = true} : vector<1x8x1xf32> -> vector<1x8x1xf32>
    %95 = vector.broadcast %94 : vector<1x8x1xf32> to vector<1x8x8xf32>
    %96 = arith.mulf %93, %95 : vector<1x8x8xf32>
    %97 = arith.truncf %96 : vector<1x8x8xf32> to vector<1x8x8xbf16>
    %c0_89 = arith.constant 0 : index
    %c0_90 = arith.constant 0 : index
    %c24_91 = arith.constant 24 : index
    %98 = vector.load %arg16[%c0_89, %c0_90, %c24_91] : memref<1x8x32xbf16, #tpu.memory_space<vmem>>, vector<1x8x8xbf16>
    tpu.vector_store %arg16[%c0_89, %c0_90, %c24_91], %97 {strides = array<i32>} : memref<1x8x32xbf16, #tpu.memory_space<vmem>>, vector<1x8x8xbf16>,
    %c0_92 = arith.constant 0 : index
    %c0_93 = arith.constant 0 : index
    %c0_94 = arith.constant 0 : index
    %99 = vector.load %arg16[%c0_92, %c0_93, %c0_94] : memref<1x8x32xbf16, #tpu.memory_space<vmem>>, vector<1x8x32xbf16>
    %c0_95 = arith.constant 0 : index
    %c0_96 = arith.constant 0 : index
    %100 = vector.load %arg10[%c0_95, %c0_96] : memref<32x32xbf16, #tpu.memory_space<vmem>>, vector<32x32xbf16>
    "tpu.trace_start"() <{level = 10 : i32, message = "bld,de->ble"}> : () -> ()
    %cst_97 = arith.constant dense<0.000000e+00> : vector<1x8x32xf32>
    %101 = tpu.matmul %99, %100, %cst_97 {dimension_numbers = #tpu.dot_dimension_numbers<[2], [0], [0, 1], [1], [0, 0, 0, 1, 1, 1], [], []>} : vector<1x8x32xbf16>, vector<32x32xbf16>, vector<1x8x32xf32> -> vector<1x8x32xf32>
    "tpu.trace_stop"() : () -> ()
    %c0_98 = arith.constant 0 : index
    %c0_99 = arith.constant 0 : index
    %102 = vector.load %arg11[%c0_98, %c0_99] : memref<1x32xf32, #tpu.memory_space<vmem>>, vector<1x32xf32>
    %103 = vector.shape_cast %102 : vector<1x32xf32> to vector<1x1x32xf32>
    %104 = vector.broadcast %103 : vector<1x1x32xf32> to vector<1x8x32xf32>
    %105 = arith.addf %101, %104 : vector<1x8x32xf32>
    %c0_100 = arith.constant 0 : index
    %c0_101 = arith.constant 0 : index
    %c0_102 = arith.constant 0 : index
    %106 = vector.load %arg12[%c0_100, %c0_101, %c0_102] : memref<1x8x32xf32, #tpu.memory_space<vmem>>, vector<1x8x32xf32>
    tpu.vector_store %arg12[%c0_100, %c0_101, %c0_102], %105 {strides = array<i32>} : memref<1x8x32xf32, #tpu.memory_space<vmem>>, vector<1x8x32xf32>,
    return
  }
  func.func @transform_0(%arg0: i32) -> (i32, i32, i32) {
    %c0_i32 = arith.constant 0 : i32
    %c0_i32_0 = arith.constant 0 : i32
    %c0_i32_1 = arith.constant 0 : i32
    return %arg0, %c0_i32, %c0_i32_0 : i32, i32, i32
  }
  func.func @transform_1(%arg0: i32) -> (i32, i32, i32) {
    %c0_i32 = arith.constant 0 : i32
    %c0_i32_0 = arith.constant 0 : i32
    %c0_i32_1 = arith.constant 0 : i32
    return %arg0, %c0_i32, %c0_i32_0 : i32, i32, i32
  }
  func.func @transform_2(%arg0: i32) -> (i32, i32, i32) {
    %c0_i32 = arith.constant 0 : i32
    %c0_i32_0 = arith.constant 0 : i32
    %c0_i32_1 = arith.constant 0 : i32
    return %arg0, %c0_i32, %c0_i32_0 : i32, i32, i32
  }
  func.func @transform_3(%arg0: i32) -> (i32, i32) {
    %c0_i32 = arith.constant 0 : i32
    %c0_i32_0 = arith.constant 0 : i32
    %c0_i32_1 = arith.constant 0 : i32
    return %c0_i32, %c0_i32_0 : i32, i32
  }
  func.func @transform_4(%arg0: i32) -> (i32, i32) {
    %c0_i32 = arith.constant 0 : i32
    %c0_i32_0 = arith.constant 0 : i32
    %c0_i32_1 = arith.constant 0 : i32
    return %c0_i32, %c0_i32_0 : i32, i32
  }
  func.func @transform_5(%arg0: i32) -> (i32, i32) {
    %c0_i32 = arith.constant 0 : i32
    %c0_i32_0 = arith.constant 0 : i32
    %c0_i32_1 = arith.constant 0 : i32
    return %c0_i32, %c0_i32_0 : i32, i32
  }
  func.func @transform_6(%arg0: i32) -> (i32, i32) {
    %c0_i32 = arith.constant 0 : i32
    %c0_i32_0 = arith.constant 0 : i32
    %c0_i32_1 = arith.constant 0 : i32
    return %c0_i32, %c0_i32_0 : i32, i32
  }
  func.func @transform_7(%arg0: i32) -> (i32, i32) {
    %c0_i32 = arith.constant 0 : i32
    %c0_i32_0 = arith.constant 0 : i32
    %c0_i32_1 = arith.constant 0 : i32
    return %c0_i32, %c0_i32_0 : i32, i32
  }
  func.func @transform_8(%arg0: i32) -> (i32, i32) {
    %c0_i32 = arith.constant 0 : i32
    %c0_i32_0 = arith.constant 0 : i32
    %c0_i32_1 = arith.constant 0 : i32
    return %c0_i32, %c0_i32_0 : i32, i32
  }
  func.func @transform_9(%arg0: i32) -> (i32, i32) {
    %c0_i32 = arith.constant 0 : i32
    %c0_i32_0 = arith.constant 0 : i32
    %c0_i32_1 = arith.constant 0 : i32
    return %c0_i32, %c0_i32_0 : i32, i32
  }
  func.func @transform_10(%arg0: i32) -> (i32, i32) {
    %c0_i32 = arith.constant 0 : i32
    %c0_i32_0 = arith.constant 0 : i32
    %c0_i32_1 = arith.constant 0 : i32
    return %c0_i32, %c0_i32_0 : i32, i32
  }
  func.func @transform_11(%arg0: i32) -> (i32, i32, i32) {
    %c0_i32 = arith.constant 0 : i32
    %c0_i32_0 = arith.constant 0 : i32
    %c0_i32_1 = arith.constant 0 : i32
    return %arg0, %c0_i32, %c0_i32_0 : i32, i32, i32
  }
}

</mosaic_0001>

<llo_original>
// kernel: tpu_custom_call.1
$region0: #{tpu_custom_call.1}
  #allocation0 [shape = 'u32[]', space=smem, size = 0x4, offset = 0x4, fixed_abs, tag = 'smem constant byte address 0x4 - core index']
  #allocation1 [shape = 'u32[144,128]{1,0:T(1,128)}', space=vmem, size = 0x12000, scoped, tag = 'internal scratch']
  #allocation2 [shape = 'bf16[1,8,32]{2,1,0:T(8,128)(2,1)}', space=vmem, size = 0x800, scoped, tag = 'scratch operand']
  #allocation3 [shape = 'bf16[1,8,32]{2,1,0:T(8,128)(2,1)}', space=vmem, size = 0x800, scoped, tag = 'scratch operand']
  #allocation4 [shape = 'bf16[1,8,32]{2,1,0:T(8,128)(2,1)}', space=vmem, size = 0x800, scoped, tag = 'scratch operand']
  #allocation5 [shape = 'bf16[1,8,32]{2,1,0:T(8,128)(2,1)}', space=vmem, size = 0x800, scoped, tag = 'scratch operand']
  %s0 = inlined_call_operand.hbm [shape: bf16[2,8,32], index: 0, kind: input, shape index: {}]
  %s1 = inlined_call_operand.hbm [shape: bf16[2,8,32], index: 1, kind: input, shape index: {}]
  %s2 = inlined_call_operand.hbm [shape: bf16[2,8,32], index: 2, kind: input, shape index: {}]
  %s3 = inlined_call_operand.hbm [shape: bf16[32,32], index: 3, kind: input, shape index: {}]
  %s4 = inlined_call_operand.hbm [shape: f32[1,32], index: 4, kind: input, shape index: {}]
  %s5 = inlined_call_operand.hbm [shape: bf16[32,32], index: 5, kind: input, shape index: {}]
  %s6 = inlined_call_operand.hbm [shape: f32[1,32], index: 6, kind: input, shape index: {}]
  %s7 = inlined_call_operand.hbm [shape: bf16[32,32], index: 7, kind: input, shape index: {}]
  %s8 = inlined_call_operand.hbm [shape: f32[1,32], index: 8, kind: input, shape index: {}]
  %s9 = inlined_call_operand.vmem [shape: bf16[32,32], index: 9, kind: input, shape index: {}]
  %s10 = inlined_call_operand.vmem [shape: f32[1,32], index: 10, kind: input, shape index: {}]
  %s11 = inlined_call_operand.hbm [shape: f32[2,8,32], index: 11, kind: output, shape index: {}]
  %s12 = sld [smem:[#allocation0]]
  $region113: #{tpu_custom_call.1} parent=0
    _
  %s14 = ssub.s32 1, %s12
  %s15 = scalar_select 0, %s14, %s12
  $region1: #{tpu_custom_call.1} parent=0
    #allocation6 [shape = 'u8[4096]{0}', space=vmem, size = 0x1000, scoped, tag = 'input window, operand 0']
    #allocation7 [shape = 's32[2]{0}', space=sflag, size = 0x8, scoped, tag = 'scoped memory for tpu_custom_call.1']
    #allocation8 [shape = 's32[2]{0}', space=sflag, size = 0x8, scoped, tag = 'scoped memory for tpu_custom_call.1']
    #allocation9 [shape = 'u8[4096]{0}', space=vmem, size = 0x1000, scoped, tag = 'input window, operand 1']
    #allocation10 [shape = 's32[2]{0}', space=sflag, size = 0x8, scoped, tag = 'scoped memory for tpu_custom_call.1']
    #allocation11 [shape = 'u8[4096]{0}', space=vmem, size = 0x1000, scoped, tag = 'input window, operand 2']
    #allocation12 [shape = 'u8[8192]{0}', space=vmem, size = 0x2000, scoped, tag = 'input window, operand 3, single buffered']
    #allocation13 [shape = 's32[1]{0}', space=sflag, size = 0x4, scoped, tag = 'scoped memory for tpu_custom_call.1']
    #allocation14 [shape = 'u8[512]{0}', space=vmem, size = 0x400, scoped, tag = 'input window, operand 4, single buffered']
    #allocation15 [shape = 'u8[8192]{0}', space=vmem, size = 0x2000, scoped, tag = 'input window, operand 5, single buffered']
    #allocation16 [shape = 's32[1]{0}', space=sflag, size = 0x4, scoped, tag = 'scoped memory for tpu_custom_call.1']
    #allocation17 [shape = 'u8[512]{0}', space=vmem, size = 0x400, scoped, tag = 'input window, operand 6, single buffered']
    #allocation18 [shape = 'u8[8192]{0}', space=vmem, size = 0x2000, scoped, tag = 'input window, operand 7, single buffered']
    #allocation19 [shape = 's32[1]{0}', space=sflag, size = 0x4, scoped, tag = 'scoped memory for tpu_custom_call.1']
    #allocation20 [shape = 'u8[512]{0}', space=vmem, size = 0x400, scoped, tag = 'input window, operand 8, single buffered']
    #allocation21 [shape = 'u8[8192]{0}', space=vmem, size = 0x2000, scoped, tag = 'output window, operand 0']
    %16 = vsyncpa [#allocation7], 0
    %s17 = scalar_lea.sflag [#allocation7], 1
    %18 = vsyncpa %s17, 0
    %19 = vsyncpa [#allocation10], 0
    %s20 = scalar_lea.sflag [#allocation10], 1
    %21 = vsyncpa %s20, 0
    %22 = vsyncpa [#allocation13], 0
    %23 = vsyncpa [#allocation16], 0
    %24 = vsyncpa [#allocation19], 0
    %25 = vsyncpa [#allocation8], 0
    %s26 = scalar_lea.sflag [#allocation8], 1
    %27 = vsyncpa %s26, 0
    loop: start=0, step=1, limit=4
    $region2: #{tpu_custom_call.1} parent=1 // loop_pre_header
      _
    $region3: #{tpu_custom_call.1} parent=1 // loop_header
      %s29 = sphi 0, %s33
      %p30 = scmp.ge.s32.totalorder %s29, 4
      %s39 = sphi 0, %s41
      %s42 = sphi 0, %s39
      %s43 = sphi 0, %s42
      %s59 = sphi 0, %s43
      %s65 = sphi 0, %s67
      %s68 = sphi 0, %s65
      %s69 = sphi 0, %s68
      %s85 = sphi 0, %s69
      %s91 = sphi 0, %s93
      %s94 = sphi 0, %s91
      %s95 = sphi 0, %s94
      %s111 = sphi 0, %s95
      %s115 = sphi 0, %s115
      %s117 = sphi 0, %s115
      %s118 = sphi 0, %s117
      %s132 = sphi 0, %s118
      %s136 = sphi 0, %s136
      %s138 = sphi 0, %s136
      %s139 = sphi 0, %s138
      %s153 = sphi 0, %s139
      %s157 = sphi 0, %s157
      %s159 = sphi 0, %s157
      %s160 = sphi 0, %s159
      %s174 = sphi 0, %s160
      %s178 = sphi 0, %s178
      %s180 = sphi 0, %s178
      %s181 = sphi 0, %s180
      %s195 = sphi 0, %s181
      %s199 = sphi 0, %s199
      %s201 = sphi 0, %s199
      %s202 = sphi 0, %s201
      %s216 = sphi 0, %s202
      %s220 = sphi 0, %s220
      %s222 = sphi 0, %s220
      %s223 = sphi 0, %s222
      %s237 = sphi 0, %s223
      %s241 = sphi 0, %s241
      %s243 = sphi 0, %s241
      %s244 = sphi 0, %s243
      %s258 = sphi 0, %s244
      %s262 = sphi 0, %s262
      %s264 = sphi 0, %s262
      %s265 = sphi 0, %s264
      %s279 = sphi 0, %s265
      %s285 = sphi 0, %s287
      %s288 = sphi 0, %s285
      %s289 = sphi 0, %s288
      %s305 = sphi 0, %s289
    $region4: #{tpu_custom_call.1} parent=1 // loop_header_branch
      %32 = sbr.rel (%p30) target = $region8
    $region5: #{tpu_custom_call.1} parent=1 // loop_body
      %s34 = ssub.s32 %s29, 1
      %s35 = ssub.s32 %s29, 2
      %s36 = sadd.s32 %s29, 1
      %s37 = ssub.s32 %s29, %s36
      %p38 = scmp.eq.s32.totalorder %s37, 0
      %s40 = sadd.s32 %s39, 1
      %s41 = scalar_select %p38, %s39, %s40
      %p44 = pneg %p38
      %p45 = scmp.eq.s32.totalorder %s29, 1
      %p46 = por %p44, %p45
      %p47 = scmp.ne.s32.totalorder %s39, %s42
      %p48 = scmp.eq.s32.totalorder %s29, 0
      %p49 = por %p47, %p48
      %p50 = scmp.ne.s32.totalorder %s39, %s42
      %p51 = scmp.eq.s32.totalorder %s34, 1
      %p52 = por %p50, %p51
      %p53 = scmp.ne.s32.totalorder %s42, %s43
      %p54 = scmp.eq.s32.totalorder %s34, 0
      %p55 = por %p53, %p54
      %p56 = scmp.ne.s32.totalorder %s42, %s43
      %p57 = scmp.eq.s32.totalorder %s35, 1
      %p58 = por %p56, %p57
      %p60 = scmp.ne.s32.totalorder %s43, %s59
      %p61 = scmp.eq.s32.totalorder %s35, 0
      %p62 = por %p60, %p61
      %s63 = ssub.s32 %s29, %s36
      %p64 = scmp.eq.s32.totalorder %s63, 0
      %s66 = sadd.s32 %s65, 1
      %s67 = scalar_select %p64, %s65, %s66
      %p70 = pneg %p64
      %p71 = scmp.eq.s32.totalorder %s29, 1
      %p72 = por %p70, %p71
      %p73 = scmp.ne.s32.totalorder %s65, %s68
      %p74 = scmp.eq.s32.totalorder %s29, 0
      %p75 = por %p73, %p74
      %p76 = scmp.ne.s32.totalorder %s65, %s68
      %p77 = scmp.eq.s32.totalorder %s34, 1
      %p78 = por %p76, %p77
      %p79 = scmp.ne.s32.totalorder %s68, %s69
      %p80 = scmp.eq.s32.totalorder %s34, 0
      %p81 = por %p79, %p80
      %p82 = scmp.ne.s32.totalorder %s68, %s69
      %p83 = scmp.eq.s32.totalorder %s35, 1
      %p84 = por %p82, %p83
      %p86 = scmp.ne.s32.totalorder %s69, %s85
      %p87 = scmp.eq.s32.totalorder %s35, 0
      %p88 = por %p86, %p87
      %s89 = ssub.s32 %s29, %s36
      %p90 = scmp.eq.s32.totalorder %s89, 0
      %s92 = sadd.s32 %s91, 1
      %s93 = scalar_select %p90, %s91, %s92
      %p96 = pneg %p90
      %p97 = scmp.eq.s32.totalorder %s29, 1
      %p98 = por %p96, %p97
      %p99 = scmp.ne.s32.totalorder %s91, %s94
      %p100 = scmp.eq.s32.totalorder %s29, 0
      %p101 = por %p99, %p100
      %p102 = scmp.ne.s32.totalorder %s91, %s94
      %p103 = scmp.eq.s32.totalorder %s34, 1
      %p104 = por %p102, %p103
      %p105 = scmp.ne.s32.totalorder %s94, %s95
      %p106 = scmp.eq.s32.totalorder %s34, 0
      %p107 = por %p105, %p106
      %p108 = scmp.ne.s32.totalorder %s94, %s95
      %p109 = scmp.eq.s32.totalorder %s35, 1
      %p110 = por %p108, %p109
      %p112 = scmp.ne.s32.totalorder %s95, %s111
      %p113 = scmp.eq.s32.totalorder %s35, 0
      %p114 = por %p112, %p113
      %s116 = sadd.s32 %s115, 1
      %p119 = scmp.eq.s32.totalorder %s29, 1
      %p120 = scmp.ne.s32.totalorder %s115, %s117
      %p121 = scmp.eq.s32.totalorder %s29, 0
      %p122 = por %p120, %p121
      %p123 = scmp.ne.s32.totalorder %s115, %s117
      %p124 = scmp.eq.s32.totalorder %s34, 1
      %p125 = por %p123, %p124
      %p126 = scmp.ne.s32.totalorder %s117, %s118
      %p127 = scmp.eq.s32.totalorder %s34, 0
      %p128 = por %p126, %p127
      %p129 = scmp.ne.s32.totalorder %s117, %s118
      %p130 = scmp.eq.s32.totalorder %s35, 1
      %p131 = por %p129, %p130
      %p133 = scmp.ne.s32.totalorder %s118, %s132
      %p134 = scmp.eq.s32.totalorder %s35, 0
      %p135 = por %p133, %p134
      %s137 = sadd.s32 %s136, 1
      %p140 = scmp.eq.s32.totalorder %s29, 1
      %p141 = scmp.ne.s32.totalorder %s136, %s138
      %p142 = scmp.eq.s32.totalorder %s29, 0
      %p143 = por %p141, %p142
      %p144 = scmp.ne.s32.totalorder %s136, %s138
      %p145 = scmp.eq.s32.totalorder %s34, 1
      %p146 = por %p144, %p145
      %p147 = scmp.ne.s32.totalorder %s138, %s139
      %p148 = scmp.eq.s32.totalorder %s34, 0
      %p149 = por %p147, %p148
      %p150 = scmp.ne.s32.totalorder %s138, %s139
      %p151 = scmp.eq.s32.totalorder %s35, 1
      %p152 = por %p150, %p151
      %p154 = scmp.ne.s32.totalorder %s139, %s153
      %p155 = scmp.eq.s32.totalorder %s35, 0
      %p156 = por %p154, %p155
      %s158 = sadd.s32 %s157, 1
      %p161 = scmp.eq.s32.totalorder %s29, 1
      %p162 = scmp.ne.s32.totalorder %s157, %s159
      %p163 = scmp.eq.s32.totalorder %s29, 0
      %p164 = por %p162, %p163
      %p165 = scmp.ne.s32.totalorder %s157, %s159
      %p166 = scmp.eq.s32.totalorder %s34, 1
      %p167 = por %p165, %p166
      %p168 = scmp.ne.s32.totalorder %s159, %s160
      %p169 = scmp.eq.s32.totalorder %s34, 0
      %p170 = por %p168, %p169
      %p171 = scmp.ne.s32.totalorder %s159, %s160
      %p172 = scmp.eq.s32.totalorder %s35, 1
      %p173 = por %p171, %p172
      %p175 = scmp.ne.s32.totalorder %s160, %s174
      %p176 = scmp.eq.s32.totalorder %s35, 0
      %p177 = por %p175, %p176
      %s179 = sadd.s32 %s178, 1
      %p182 = scmp.eq.s32.totalorder %s29, 1
      %p183 = scmp.ne.s32.totalorder %s178, %s180
      %p184 = scmp.eq.s32.totalorder %s29, 0
      %p185 = por %p183, %p184
      %p186 = scmp.ne.s32.totalorder %s178, %s180
      %p187 = scmp.eq.s32.totalorder %s34, 1
      %p188 = por %p186, %p187
      %p189 = scmp.ne.s32.totalorder %s180, %s181
      %p190 = scmp.eq.s32.totalorder %s34, 0
      %p191 = por %p189, %p190
      %p192 = scmp.ne.s32.totalorder %s180, %s181
      %p193 = scmp.eq.s32.totalorder %s35, 1
      %p194 = por %p192, %p193
      %p196 = scmp.ne.s32.totalorder %s181, %s195
      %p197 = scmp.eq.s32.totalorder %s35, 0
      %p198 = por %p196, %p197
      %s200 = sadd.s32 %s199, 1
      %p203 = scmp.eq.s32.totalorder %s29, 1
      %p204 = scmp.ne.s32.totalorder %s199, %s201
      %p205 = scmp.eq.s32.totalorder %s29, 0
      %p206 = por %p204, %p205
      %p207 = scmp.ne.s32.totalorder %s199, %s201
      %p208 = scmp.eq.s32.totalorder %s34, 1
      %p209 = por %p207, %p208
      %p210 = scmp.ne.s32.totalorder %s201, %s202
      %p211 = scmp.eq.s32.totalorder %s34, 0
      %p212 = por %p210, %p211
      %p213 = scmp.ne.s32.totalorder %s201, %s202
      %p214 = scmp.eq.s32.totalorder %s35, 1
      %p215 = por %p213, %p214
      %p217 = scmp.ne.s32.totalorder %s202, %s216
      %p218 = scmp.eq.s32.totalorder %s35, 0
      %p219 = por %p217, %p218
      %s221 = sadd.s32 %s220, 1
      %p224 = scmp.eq.s32.totalorder %s29, 1
      %p225 = scmp.ne.s32.totalorder %s220, %s222
      %p226 = scmp.eq.s32.totalorder %s29, 0
      %p227 = por %p225, %p226
      %p228 = scmp.ne.s32.totalorder %s220, %s222
      %p229 = scmp.eq.s32.totalorder %s34, 1
      %p230 = por %p228, %p229
      %p231 = scmp.ne.s32.totalorder %s222, %s223
      %p232 = scmp.eq.s32.totalorder %s34, 0
      %p233 = por %p231, %p232
      %p234 = scmp.ne.s32.totalorder %s222, %s223
      %p235 = scmp.eq.s32.totalorder %s35, 1
      %p236 = por %p234, %p235
      %p238 = scmp.ne.s32.totalorder %s223, %s237
      %p239 = scmp.eq.s32.totalorder %s35, 0
      %p240 = por %p238, %p239
      %s242 = sadd.s32 %s241, 1
      %p245 = scmp.eq.s32.totalorder %s29, 1
      %p246 = scmp.ne.s32.totalorder %s241, %s243
      %p247 = scmp.eq.s32.totalorder %s29, 0
      %p248 = por %p246, %p247
      %p249 = scmp.ne.s32.totalorder %s241, %s243
      %p250 = scmp.eq.s32.totalorder %s34, 1
      %p251 = por %p249, %p250
      %p252 = scmp.ne.s32.totalorder %s243, %s244
      %p253 = scmp.eq.s32.totalorder %s34, 0
      %p254 = por %p252, %p253
      %p255 = scmp.ne.s32.totalorder %s243, %s244
      %p256 = scmp.eq.s32.totalorder %s35, 1
      %p257 = por %p255, %p256
      %p259 = scmp.ne.s32.totalorder %s244, %s258
      %p260 = scmp.eq.s32.totalorder %s35, 0
      %p261 = por %p259, %p260
      %s263 = sadd.s32 %s262, 1
      %p266 = scmp.eq.s32.totalorder %s29, 1
      %p267 = scmp.ne.s32.totalorder %s262, %s264
      %p268 = scmp.eq.s32.totalorder %s29, 0
      %p269 = por %p267, %p268
      %p270 = scmp.ne.s32.totalorder %s262, %s264
      %p271 = scmp.eq.s32.totalorder %s34, 1
      %p272 = por %p270, %p271
      %p273 = scmp.ne.s32.totalorder %s264, %s265
      %p274 = scmp.eq.s32.totalorder %s34, 0
      %p275 = por %p273, %p274
      %p276 = scmp.ne.s32.totalorder %s264, %s265
      %p277 = scmp.eq.s32.totalorder %s35, 1
      %p278 = por %p276, %p277
      %p280 = scmp.ne.s32.totalorder %s265, %s279
      %p281 = scmp.eq.s32.totalorder %s35, 0
      %p282 = por %p280, %p281
      %s283 = ssub.s32 %s29, %s36
      %p284 = scmp.eq.s32.totalorder %s283, 0
      %s286 = sadd.s32 %s285, 1
      %s287 = scalar_select %p284, %s285, %s286
      %p290 = pneg %p284
      %p291 = scmp.eq.s32.totalorder %s29, 1
      %p292 = por %p290, %p291
      %p293 = scmp.ne.s32.totalorder %s285, %s288
      %p294 = scmp.eq.s32.totalorder %s29, 0
      %p295 = por %p293, %p294
      %p296 = scmp.ne.s32.totalorder %s285, %s288
      %p297 = scmp.eq.s32.totalorder %s34, 1
      %p298 = por %p296, %p297
      %p299 = scmp.ne.s32.totalorder %s288, %s289
      %p300 = scmp.eq.s32.totalorder %s34, 0
      %p301 = por %p299, %p300
      %p302 = scmp.ne.s32.totalorder %s288, %s289
      %p303 = scmp.eq.s32.totalorder %s35, 1
      %p304 = por %p302, %p303
      %p306 = scmp.ne.s32.totalorder %s289, %s305
      %p307 = scmp.eq.s32.totalorder %s35, 0
      %p308 = por %p306, %p307
      %p309 = scmp.le.s32.totalorder 1, %s29
      %p310 = scmp.lt.s32.totalorder %s29, 3
      %p311 = pnand %p309, %p310
      %p312 = pneg %p311
      // Predicated region
      $region9: #{tpu_custom_call.1} parent=5 // pred_check
        _
      $region10: #{tpu_custom_call.1} parent=5 // pred_check_branch
        %314 = sbr.rel (%p311) target = $region12
      $region11: #{tpu_custom_call.1} parent=5 // pred_region
        %s315 = ssub.s32 %s29, 1
        // Predicated region
        $region13: #{tpu_custom_call.1} parent=11 // pred_check
          %p316 = pneg %p128
        $region14: #{tpu_custom_call.1} parent=11 // pred_check_branch
          %318 = sbr.rel (%p316) target = $region16
        $region15: #{tpu_custom_call.1} parent=11 // pred_region
          %s320 = ssub.s32 256, 256
          %321 = vsyncadd [#allocation13], %s320
          %s322 = sshll.u32 [#allocation12], 4
          %s323 = int_to_ptr.vmem [resolvable:$true] %s322
          %328 = dma.hbm_to_vmem [thread:$0]  %s3, 256, %s323, [#allocation13], 64, 64, 4
        $region16: #{tpu_custom_call.1} parent=11 // pred_fallthru
          _
        // Predicated region
        $region17: #{tpu_custom_call.1} parent=11 // pred_check
          %p329 = pneg %p149
        $region18: #{tpu_custom_call.1} parent=11 // pred_check_branch
          %331 = sbr.rel (%p329) target = $region20
        $region19: #{tpu_custom_call.1} parent=11 // pred_region
          %s333 = ssub.s32 16, 16
          %334 = vsyncadd [#allocation13], %s333
          %s336 = sshll.u32 [#allocation14], 4
          %s337 = int_to_ptr.vmem [resolvable:$true] %s336
          %339 = dma.hbm_to_vmem [thread:$0]  %s4, 16, %s337, [#allocation13]
        $region20: #{tpu_custom_call.1} parent=11 // pred_fallthru
          _
        // Predicated region
        $region21: #{tpu_custom_call.1} parent=11 // pred_check
          %p340 = pneg %p170
        $region22: #{tpu_custom_call.1} parent=11 // pred_check_branch
          %342 = sbr.rel (%p340) target = $region24
        $region23: #{tpu_custom_call.1} parent=11 // pred_region
          %s344 = ssub.s32 256, 256
          %345 = vsyncadd [#allocation16], %s344
          %s346 = sshll.u32 [#allocation15], 4
          %s347 = int_to_ptr.vmem [resolvable:$true] %s346
          %352 = dma.hbm_to_vmem [thread:$0]  %s5, 256, %s347, [#allocation16], 64, 64, 4
        $region24: #{tpu_custom_call.1} parent=11 // pred_fallthru
          _
        // Predicated region
        $region25: #{tpu_custom_call.1} parent=11 // pred_check
          %p353 = pneg %p191
        $region26: #{tpu_custom_call.1} parent=11 // pred_check_branch
          %355 = sbr.rel (%p353) target = $region28
        $region27: #{tpu_custom_call.1} parent=11 // pred_region
          %s357 = ssub.s32 16, 16
          %358 = vsyncadd [#allocation16], %s357
          %s360 = sshll.u32 [#allocation17], 4
          %s361 = int_to_ptr.vmem [resolvable:$true] %s360
          %363 = dma.hbm_to_vmem [thread:$0]  %s6, 16, %s361, [#allocation16]
        $region28: #{tpu_custom_call.1} parent=11 // pred_fallthru
          _
        // Predicated region
        $region29: #{tpu_custom_call.1} parent=11 // pred_check
          %p364 = pneg %p212
        $region30: #{tpu_custom_call.1} parent=11 // pred_check_branch
          %366 = sbr.rel (%p364) target = $region32
        $region31: #{tpu_custom_call.1} parent=11 // pred_region
          %s368 = ssub.s32 256, 256
          %369 = vsyncadd [#allocation19], %s368
          %s370 = sshll.u32 [#allocation18], 4
          %s371 = int_to_ptr.vmem [resolvable:$true] %s370
          %376 = dma.hbm_to_vmem [thread:$0]  %s7, 256, %s371, [#allocation19], 64, 64, 4
        $region32: #{tpu_custom_call.1} parent=11 // pred_fallthru
          _
        // Predicated region
        $region33: #{tpu_custom_call.1} parent=11 // pred_check
          %p377 = pneg %p233
        $region34: #{tpu_custom_call.1} parent=11 // pred_check_branch
          %379 = sbr.rel (%p377) target = $region36
        $region35: #{tpu_custom_call.1} parent=11 // pred_region
          %s381 = ssub.s32 16, 16
          %382 = vsyncadd [#allocation19], %s381
          %s384 = sshll.u32 [#allocation20], 4
          %s385 = int_to_ptr.vmem [resolvable:$true] %s384
          %387 = dma.hbm_to_vmem [thread:$0]  %s8, 16, %s385, [#allocation19]
        $region36: #{tpu_custom_call.1} parent=11 // pred_fallthru
          _
        // Predicated region
        $region37: #{tpu_custom_call.1} parent=11 // pred_check
          %p388 = pneg %p254
        $region38: #{tpu_custom_call.1} parent=11 // pred_check_branch
          %390 = sbr.rel (%p388) target = $region40
        $region39: #{tpu_custom_call.1} parent=11 // pred_region
          _
        $region40: #{tpu_custom_call.1} parent=11 // pred_fallthru
          _
        // Predicated region
        $region41: #{tpu_custom_call.1} parent=11 // pred_check
          %p391 = pneg %p275
        $region42: #{tpu_custom_call.1} parent=11 // pred_check_branch
          %393 = sbr.rel (%p391) target = $region44
        $region43: #{tpu_custom_call.1} parent=11 // pred_region
          _
        $region44: #{tpu_custom_call.1} parent=11 // pred_fallthru
          _
      $region12: #{tpu_custom_call.1} parent=5 // pred_fallthru
        _
      %p394 = scmp.lt.s32.totalorder %s29, 2
      // Predicated region
      $region45: #{tpu_custom_call.1} parent=5 // pred_check
        %p395 = pneg %p394
      $region46: #{tpu_custom_call.1} parent=5 // pred_check_branch
        %397 = sbr.rel (%p395) target = $region48
      $region47: #{tpu_custom_call.1} parent=5 // pred_region
        // Predicated region
        $region49: #{tpu_custom_call.1} parent=47 // pred_check
          %p398 = pneg %p49
        $region50: #{tpu_custom_call.1} parent=47 // pred_check_branch
          %400 = sbr.rel (%p398) target = $region52
        $region51: #{tpu_custom_call.1} parent=47 // pred_region
          %s401 = sand.u32 %s39, 1
          %s402 = scalar_lea.sflag [#allocation7], %s401
          %s403 = sand.u32 %s39, 1
          %s404 = smul.addr %s403, 4
          %s405 = scalar_lea.vmem [#allocation6], %s404
          %s407 = ssub.s32 64, 64
          %408 = vsyncadd %s402, %s407
          %s409 = smul.addr %s29, 64
          %s410 = scalar_lea.hbm %s0, %s409
          %s412 = sshll.u32 %s405, 4
          %s413 = int_to_ptr.vmem [resolvable:$true] %s412
          %415 = dma.hbm_to_vmem [thread:$0]  %s410, 64, %s413, %s402
        $region52: #{tpu_custom_call.1} parent=47 // pred_fallthru
          _
        // Predicated region
        $region53: #{tpu_custom_call.1} parent=47 // pred_check
          %p416 = pneg %p75
        $region54: #{tpu_custom_call.1} parent=47 // pred_check_branch
          %418 = sbr.rel (%p416) target = $region56
        $region55: #{tpu_custom_call.1} parent=47 // pred_region
          %s419 = sand.u32 %s29, 1
          %s420 = scalar_lea.sflag [#allocation10], %s419
          %s421 = sand.u32 %s65, 1
          %s422 = smul.addr %s421, 4
          %s423 = scalar_lea.vmem [#allocation9], %s422
          %s425 = ssub.s32 64, 64
          %426 = vsyncadd %s420, %s425
          %s427 = smul.addr %s29, 64
          %s428 = scalar_lea.hbm %s1, %s427
          %s430 = sshll.u32 %s423, 4
          %s431 = int_to_ptr.vmem [resolvable:$true] %s430
          %433 = dma.hbm_to_vmem [thread:$0]  %s428, 64, %s431, %s420
        $region56: #{tpu_custom_call.1} parent=47 // pred_fallthru
          _
        // Predicated region
        $region57: #{tpu_custom_call.1} parent=47 // pred_check
          %p434 = pneg %p101
        $region58: #{tpu_custom_call.1} parent=47 // pred_check_branch
          %436 = sbr.rel (%p434) target = $region60
        $region59: #{tpu_custom_call.1} parent=47 // pred_region
          %s437 = sand.u32 %s29, 1
          %s438 = scalar_lea.sflag [#allocation10], %s437
          %s439 = sand.u32 %s91, 1
          %s440 = smul.addr %s439, 4
          %s441 = scalar_lea.vmem [#allocation11], %s440
          %s443 = ssub.s32 64, 64
          %444 = vsyncadd %s438, %s443
          %s445 = smul.addr %s29, 64
          %s446 = scalar_lea.hbm %s2, %s445
          %s448 = sshll.u32 %s441, 4
          %s449 = int_to_ptr.vmem [resolvable:$true] %s448
          %451 = dma.hbm_to_vmem [thread:$0]  %s446, 64, %s449, %s438
        $region60: #{tpu_custom_call.1} parent=47 // pred_fallthru
          _
      $region48: #{tpu_custom_call.1} parent=5 // pred_fallthru
        _
      %p452 = scmp.le.s32.totalorder 1, %s29
      %p453 = scmp.lt.s32.totalorder %s29, 3
      %p454 = pnand %p452, %p453
      %p455 = pneg %p454
      // Predicated region
      $region61: #{tpu_custom_call.1} parent=5 // pred_check
        _
      $region62: #{tpu_custom_call.1} parent=5 // pred_check_branch
        %457 = sbr.rel (%p454) target = $region64
      $region63: #{tpu_custom_call.1} parent=5 // pred_region
        %s458 = ssub.s32 %s29, 1
        %s459 = sand.u32 %s42, 1
        %s460 = scalar_lea.sflag [#allocation7], %s459
        %s461 = sand.u32 %s42, 1
        %s462 = smul.addr %s461, 4
        %s463 = scalar_lea.vmem [#allocation6], %s462
        // Predicated region
        $region65: #{tpu_custom_call.1} parent=63 // pred_check
          %p464 = pneg %p55
        $region66: #{tpu_custom_call.1} parent=63 // pred_check_branch
          %466 = sbr.rel (%p464) target = $region68
        $region67: #{tpu_custom_call.1} parent=63 // pred_region
          %467 = dma.done %s460, 64
        $region68: #{tpu_custom_call.1} parent=63 // pred_fallthru
          _
        %s468 = sand.u32 %s34, 1
        %s469 = scalar_lea.sflag [#allocation10], %s468
        %s470 = sand.u32 %s68, 1
        %s471 = smul.addr %s470, 4
        %s472 = scalar_lea.vmem [#allocation9], %s471
        // Predicated region
        $region69: #{tpu_custom_call.1} parent=63 // pred_check
          %p473 = pneg %p81
        $region70: #{tpu_custom_call.1} parent=63 // pred_check_branch
          %475 = sbr.rel (%p473) target = $region72
        $region71: #{tpu_custom_call.1} parent=63 // pred_region
          %476 = dma.done %s469, 64
        $region72: #{tpu_custom_call.1} parent=63 // pred_fallthru
          _
        %s477 = sand.u32 %s34, 1
        %s478 = scalar_lea.sflag [#allocation10], %s477
        %s479 = sand.u32 %s94, 1
        %s480 = smul.addr %s479, 4
        %s481 = scalar_lea.vmem [#allocation11], %s480
        // Predicated region
        $region73: #{tpu_custom_call.1} parent=63 // pred_check
          %p482 = pneg %p107
        $region74: #{tpu_custom_call.1} parent=63 // pred_check_branch
          %484 = sbr.rel (%p482) target = $region76
        $region75: #{tpu_custom_call.1} parent=63 // pred_region
          %485 = dma.done %s478, 64
        $region76: #{tpu_custom_call.1} parent=63 // pred_fallthru
          _
        // Predicated region
        $region77: #{tpu_custom_call.1} parent=63 // pred_check
          %p486 = pneg %p128
        $region78: #{tpu_custom_call.1} parent=63 // pred_check_branch
          %488 = sbr.rel (%p486) target = $region80
        $region79: #{tpu_custom_call.1} parent=63 // pred_region
          %489 = dma.done [#allocation13], 256
        $region80: #{tpu_custom_call.1} parent=63 // pred_fallthru
          _
        // Predicated region
        $region81: #{tpu_custom_call.1} parent=63 // pred_check
          %p490 = pneg %p149
        $region82: #{tpu_custom_call.1} parent=63 // pred_check_branch
          %492 = sbr.rel (%p490) target = $region84
        $region83: #{tpu_custom_call.1} parent=63 // pred_region
          %493 = dma.done [#allocation13], 16
        $region84: #{tpu_custom_call.1} parent=63 // pred_fallthru
          _
        // Predicated region
        $region85: #{tpu_custom_call.1} parent=63 // pred_check
          %p494 = pneg %p170
        $region86: #{tpu_custom_call.1} parent=63 // pred_check_branch
          %496 = sbr.rel (%p494) target = $region88
        $region87: #{tpu_custom_call.1} parent=63 // pred_region
          %497 = dma.done [#allocation16], 256
        $region88: #{tpu_custom_call.1} parent=63 // pred_fallthru
          _
        // Predicated region
        $region89: #{tpu_custom_call.1} parent=63 // pred_check
          %p498 = pneg %p191
        $region90: #{tpu_custom_call.1} parent=63 // pred_check_branch
          %500 = sbr.rel (%p498) target = $region92
        $region91: #{tpu_custom_call.1} parent=63 // pred_region
          %501 = dma.done [#allocation16], 16
        $region92: #{tpu_custom_call.1} parent=63 // pred_fallthru
          _
        // Predicated region
        $region93: #{tpu_custom_call.1} parent=63 // pred_check
          %p502 = pneg %p212
        $region94: #{tpu_custom_call.1} parent=63 // pred_check_branch
          %504 = sbr.rel (%p502) target = $region96
        $region95: #{tpu_custom_call.1} parent=63 // pred_region
          %505 = dma.done [#allocation19], 256
        $region96: #{tpu_custom_call.1} parent=63 // pred_fallthru
          _
        // Predicated region
        $region97: #{tpu_custom_call.1} parent=63 // pred_check
          %p506 = pneg %p233
        $region98: #{tpu_custom_call.1} parent=63 // pred_check_branch
          %508 = sbr.rel (%p506) target = $region100
        $region99: #{tpu_custom_call.1} parent=63 // pred_region
          %509 = dma.done [#allocation19], 16
        $region100: #{tpu_custom_call.1} parent=63 // pred_fallthru
          _
        %s510 = sand.u32 %s42, 1
        %s511 = scalar_lea.sflag [#allocation7], %s510
        %s512 = sand.u32 %s42, 1
        %s513 = smul.addr %s512, 4
        %s514 = scalar_lea.vmem [#allocation6], %s513
        %p515 = pneg %p55
        %p516 = pneg %p52
        %s517 = sand.u32 %s34, 1
        %s518 = scalar_lea.sflag [#allocation10], %s517
        %s519 = sand.u32 %s68, 1
        %s520 = smul.addr %s519, 4
        %s521 = scalar_lea.vmem [#allocation9], %s520
        %p522 = pneg %p81
        %p523 = pneg %p78
        %s524 = sand.u32 %s34, 1
        %s525 = scalar_lea.sflag [#allocation10], %s524
        %s526 = sand.u32 %s94, 1
        %s527 = smul.addr %s526, 4
        %s528 = scalar_lea.vmem [#allocation11], %s527
        %p529 = pneg %p107
        %p530 = pneg %p104
        %p531 = pneg %p128
        %p532 = pneg %p125
        %p533 = pneg %p149
        %p534 = pneg %p146
        %p535 = pneg %p170
        %p536 = pneg %p167
        %p537 = pneg %p191
        %p538 = pneg %p188
        %p539 = pneg %p212
        %p540 = pneg %p209
        %p541 = pneg %p233
        %p542 = pneg %p230
        %p543 = pneg %p254
        %p544 = pneg %p251
        %p545 = pneg %p275
        %p546 = pneg %p272
        %p547 = pneg %p301
        %p548 = pneg %p298
        %s549 = sand.u32 %s288, 1
        %s550 = scalar_lea.sflag [#allocation8], %s549
        %s551 = sand.u32 %s288, 1
        %s552 = smul.addr %s551, 8
        %s553 = scalar_lea.vmem [#allocation21], %s552
        %v555 = vld [vmem:[%s463] sm:$0xf]
        %v556 = vld [vmem:[#allocation12] sm:$0xf]
        %v557 = vld [vmem:[#allocation12 + $0x4] sm:$0xf]
        %v558 = vld [vmem:[#allocation12 + $0x8] sm:$0xf]
        %v559 = vld [vmem:[#allocation12 + $0xc] sm:$0xf]
        %v560 = vld [vmem:[#allocation14] sm:$0x1]
        %v562 = vlaneseq
        %v563 = vshrl.u32 %v562, 7
        %v564 = vsub.s32 0, %v563
        %v565 = vrot.slane %v560, %v564
        %v571 = vunpack.c.l.b16 %v556
        %v572 = vunpack.c.l.b16 %v557
        %v573 = vunpack.c.l.b16 %v558
        %v574 = vunpack.c.l.b16 %v559
        %v575 = vpack.c.b16 %v572, %v571
        %v576 = vpack.c.b16 %v574, %v573
        %vm579 = vcmask 261120
        %v581 = vsel %vm579, %v555, 0
        %583 = vmatprep.subr.bf16.mxu0 0
        %584 = vmatpush1.bf16.msra.mxu0 0
        %585 = vmatprep.subr.bf16.mxu0 0
        %586 = vmatpush1.bf16.msra.mxu0 0
        %587 = vmatprep.subr.bf16.mxu0 0
        %588 = vmatpush1.bf16.msra.mxu0 0
        %589 = vmatprep.subr.bf16.mxu0 0
        %590 = vmatpush1.bf16.msra.mxu0 0
        %591 = vmatprep.subr.bf16.mxu0 0
        %592 = vmatpush1.bf16.msra.mxu0 0
        %593 = vmatprep.subr.bf16.mxu0 0
        %594 = vmatpush1.bf16.msra.mxu0 0
        %595 = vmatprep.subr.bf16.mxu0 0
        %596 = vmatpush1.bf16.msra.mxu0 %v576
        %597 = vmatprep.subr.bf16.mxu0 0
        %598 = vmatpush1.bf16.msra.mxu0 %v575
        %599 = vmatprep.subr.bf16.mxu0 0
        %600 = vmatpush2.bf16.msra.mxu0 0
        %601 = vmatprep.subr.bf16.mxu0 0
        %602 = vmatpush2.bf16.msra.mxu0 0
        %603 = vmatprep.subr.bf16.mxu0 0
        %604 = vmatpush2.bf16.msra.mxu0 0
        %605 = vmatprep.subr.bf16.mxu0 0
        %606 = vmatpush2.bf16.msra.mxu0 0
        %607 = vmatprep.subr.bf16.mxu0 0
        %608 = vmatpush2.bf16.msra.mxu0 0
        %609 = vmatprep.subr.bf16.mxu0 0
        %610 = vmatpush2.bf16.msra.mxu0 0
        %611 = vmatprep.subr.bf16.mxu0 0
        %612 = vmatpush2.bf16.msra.mxu0 0
        %613 = vmatprep.subr.bf16.mxu0 0
        %614 = vmatpush2.bf16.msra.mxu0 0
        %615 = vmatprep.mubr.bf16.mxu0 0
        %616 = vmatmul.mubr.bf16.gmra.mxu0 %v581
        %v617 = vpop.f32.mrf.mxu0
        %v618 = vadd.f32 %v565, %v617
        %v619 = vpop.f32.mrf.mxu0
        %v620 = vpop.f32.mrf.mxu0
        %v621 = vpop.f32.mrf.mxu0
        %622 = vdwg.mxu0
        %v623 = vpack.c.bf16 %v618, %v618
        %vm624 = vcmask 257024
        %625 = vst.msk [vmem:[#allocation2] sm:$0xf] %vm624, %v623
        %v626 = vld [vmem:[%s472] sm:$0xf]
        %v627 = vld [vmem:[#allocation15] sm:$0xf]
        %v628 = vld [vmem:[#allocation15 + $0x4] sm:$0xf]
        %v629 = vld [vmem:[#allocation15 + $0x8] sm:$0xf]
        %v630 = vld [vmem:[#allocation15 + $0xc] sm:$0xf]
        %v631 = vld [vmem:[#allocation17] sm:$0x1]
        %v633 = vlaneseq
        %v634 = vshrl.u32 %v633, 7
        %v635 = vsub.s32 0, %v634
        %v636 = vrot.slane %v631, %v635
        %v642 = vunpack.c.l.b16 %v627
        %v643 = vunpack.c.l.b16 %v628
        %v644 = vunpack.c.l.b16 %v629
        %v645 = vunpack.c.l.b16 %v630
        %v646 = vpack.c.b16 %v643, %v642
        %v647 = vpack.c.b16 %v645, %v644
        %v651 = vsel %vm579, %v626, 0
        %653 = vmatprep.subr.bf16.mxu0 0
        %654 = vmatpush1.bf16.msra.mxu0 0
        %655 = vmatprep.subr.bf16.mxu0 0
        %656 = vmatpush1.bf16.msra.mxu0 0
        %657 = vmatprep.subr.bf16.mxu0 0
        %658 = vmatpush1.bf16.msra.mxu0 0
        %659 = vmatprep.subr.bf16.mxu0 0
        %660 = vmatpush1.bf16.msra.mxu0 0
        %661 = vmatprep.subr.bf16.mxu0 0
        %662 = vmatpush1.bf16.msra.mxu0 0
        %663 = vmatprep.subr.bf16.mxu0 0
        %664 = vmatpush1.bf16.msra.mxu0 0
        %665 = vmatprep.subr.bf16.mxu0 0
        %666 = vmatpush1.bf16.msra.mxu0 %v647
        %667 = vmatprep.subr.bf16.mxu0 0
        %668 = vmatpush1.bf16.msra.mxu0 %v646
        %669 = vmatprep.subr.bf16.mxu0 0
        %670 = vmatpush2.bf16.msra.mxu0 0
        %671 = vmatprep.subr.bf16.mxu0 0
        %672 = vmatpush2.bf16.msra.mxu0 0
        %673 = vmatprep.subr.bf16.mxu0 0
        %674 = vmatpush2.bf16.msra.mxu0 0
        %675 = vmatprep.subr.bf16.mxu0 0
        %676 = vmatpush2.bf16.msra.mxu0 0
        %677 = vmatprep.subr.bf16.mxu0 0
        %678 = vmatpush2.bf16.msra.mxu0 0
        %679 = vmatprep.subr.bf16.mxu0 0
        %680 = vmatpush2.bf16.msra.mxu0 0
        %681 = vmatprep.subr.bf16.mxu0 0
        %682 = vmatpush2.bf16.msra.mxu0 0
        %683 = vmatprep.subr.bf16.mxu0 0
        %684 = vmatpush2.bf16.msra.mxu0 0
        %685 = vmatprep.mubr.bf16.mxu0 0
        %686 = vmatmul.mubr.bf16.gmra.mxu0 %v651
        %v687 = vpop.f32.mrf.mxu0
        %v688 = vadd.f32 %v636, %v687
        %v689 = vpop.f32.mrf.mxu0
        %v690 = vpop.f32.mrf.mxu0
        %v691 = vpop.f32.mrf.mxu0
        %692 = vdwg.mxu0
        %v693 = vpack.c.bf16 %v688, %v688
        %694 = vst.msk [vmem:[#allocation3] sm:$0xf] %vm624, %v693
        %v695 = vld [vmem:[%s481] sm:$0xf]
        %v696 = vld [vmem:[#allocation18] sm:$0xf]
        %v697 = vld [vmem:[#allocation18 + $0x4] sm:$0xf]
        %v698 = vld [vmem:[#allocation18 + $0x8] sm:$0xf]
        %v699 = vld [vmem:[#allocation18 + $0xc] sm:$0xf]
        %v700 = vld [vmem:[#allocation20] sm:$0x1]
        %v702 = vlaneseq
        %v703 = vshrl.u32 %v702, 7
        %v704 = vsub.s32 0, %v703
        %v705 = vrot.slane %v700, %v704
        %v711 = vunpack.c.l.b16 %v696
        %v712 = vunpack.c.l.b16 %v697
        %v713 = vunpack.c.l.b16 %v698
        %v714 = vunpack.c.l.b16 %v699
        %v715 = vpack.c.b16 %v712, %v711
        %v716 = vpack.c.b16 %v714, %v713
        %v720 = vsel %vm579, %v695, 0
        %722 = vmatprep.subr.bf16.mxu0 0
        %723 = vmatpush1.bf16.msra.mxu0 0
        %724 = vmatprep.subr.bf16.mxu0 0
        %725 = vmatpush1.bf16.msra.mxu0 0
        %726 = vmatprep.subr.bf16.mxu0 0
        %727 = vmatpush1.bf16.msra.mxu0 0
        %728 = vmatprep.subr.bf16.mxu0 0
        %729 = vmatpush1.bf16.msra.mxu0 0
        %730 = vmatprep.subr.bf16.mxu0 0
        %731 = vmatpush1.bf16.msra.mxu0 0
        %732 = vmatprep.subr.bf16.mxu0 0
        %733 = vmatpush1.bf16.msra.mxu0 0
        %734 = vmatprep.subr.bf16.mxu0 0
        %735 = vmatpush1.bf16.msra.mxu0 %v716
        %736 = vmatprep.subr.bf16.mxu0 0
        %737 = vmatpush1.bf16.msra.mxu0 %v715
        %738 = vmatprep.subr.bf16.mxu0 0
        %739 = vmatpush2.bf16.msra.mxu0 0
        %740 = vmatprep.subr.bf16.mxu0 0
        %741 = vmatpush2.bf16.msra.mxu0 0
        %742 = vmatprep.subr.bf16.mxu0 0
        %743 = vmatpush2.bf16.msra.mxu0 0
        %744 = vmatprep.subr.bf16.mxu0 0
        %745 = vmatpush2.bf16.msra.mxu0 0
        %746 = vmatprep.subr.bf16.mxu0 0
        %747 = vmatpush2.bf16.msra.mxu0 0
        %748 = vmatprep.subr.bf16.mxu0 0
        %749 = vmatpush2.bf16.msra.mxu0 0
        %750 = vmatprep.subr.bf16.mxu0 0
        %751 = vmatpush2.bf16.msra.mxu0 0
        %752 = vmatprep.subr.bf16.mxu0 0
        %753 = vmatpush2.bf16.msra.mxu0 0
        %754 = vmatprep.mubr.bf16.mxu0 0
        %755 = vmatmul.mubr.bf16.gmra.mxu0 %v720
        %v756 = vpop.f32.mrf.mxu0
        %v757 = vadd.f32 %v705, %v756
        %v758 = vpop.f32.mrf.mxu0
        %v759 = vpop.f32.mrf.mxu0
        %v760 = vpop.f32.mrf.mxu0
        %761 = vdwg.mxu0
        %v762 = vpack.c.bf16 %v757, %v757
        %763 = vst.msk [vmem:[#allocation4] sm:$0xf] %vm624, %v762
        %v764 = vld [vmem:[#allocation2] sm:$0xf]
        %v765 = vld [vmem:[#allocation3] sm:$0xf]
        %v766 = vld [vmem:[#allocation4] sm:$0xf]
        %vm767 = vcmask 64512
        %v769 = vsel %vm767, %v764, 0
        %v772 = vsel %vm767, %v765, 0
        %774 = vmatprep.subr.bf16.mxu0 0
        %775 = vmatpush1.bf16.xpose.msra.mxu0 0
        %776 = vmatprep.subr.bf16.mxu0 0
        %777 = vmatpush1.bf16.xpose.msra.mxu0 0
        %778 = vmatprep.subr.bf16.mxu0 0
        %779 = vmatpush1.bf16.xpose.msra.mxu0 0
        %780 = vmatprep.subr.bf16.mxu0 0
        %781 = vmatpush1.bf16.xpose.msra.mxu0 0
        %782 = vmatprep.subr.bf16.mxu0 0
        %783 = vmatpush1.bf16.xpose.msra.mxu0 0
        %784 = vmatprep.subr.bf16.mxu0 0
        %785 = vmatpush1.bf16.xpose.msra.mxu0 0
        %786 = vmatprep.subr.bf16.mxu0 0
        %787 = vmatpush1.bf16.xpose.msra.mxu0 0
        %788 = vmatprep.subr.bf16.mxu0 0
        %789 = vmatpush1.bf16.xpose.msra.mxu0 %v772
        %790 = vmatprep.subr.bf16.mxu0 0
        %791 = vmatpush2.bf16.xpose.msra.mxu0 0
        %792 = vmatprep.subr.bf16.mxu0 0
        %793 = vmatpush2.bf16.xpose.msra.mxu0 0
        %794 = vmatprep.subr.bf16.mxu0 0
        %795 = vmatpush2.bf16.xpose.msra.mxu0 0
        %796 = vmatprep.subr.bf16.mxu0 0
        %797 = vmatpush2.bf16.xpose.msra.mxu0 0
        %798 = vmatprep.subr.bf16.mxu0 0
        %799 = vmatpush2.bf16.xpose.msra.mxu0 0
        %800 = vmatprep.subr.bf16.mxu0 0
        %801 = vmatpush2.bf16.xpose.msra.mxu0 0
        %802 = vmatprep.subr.bf16.mxu0 0
        %803 = vmatpush2.bf16.xpose.msra.mxu0 0
        %804 = vmatprep.subr.bf16.mxu0 0
        %805 = vmatpush2.bf16.xpose.msra.mxu0 0
        %806 = vmatprep.mubr.bf16.mxu0 0
        %807 = vmatmul.mubr.bf16.gmra.mxu0 %v769
        %v808 = vpop.f32.mrf.mxu0
        %v809 = vadd.f32 0.0, %v808
        %v810 = vpop.f32.mrf.mxu0
        %v811 = vpop.f32.mrf.mxu0
        %v812 = vpop.f32.mrf.mxu0
        %813 = vdwg.mxu0
        %v814 = vsel %vm767, %v809, -inf
        %815 = vmax.xlane.f32.xlu0 %v814
        %v816 = vpop.xlane.xlu0 %815
        %v817 = vsub.f32 %v809, %v816
        %v818 = vmul.f32 %v817, 1.442695
        %v819 = vpow.pop %v818
        %v820 = vsel %vm767, %v819, 0.0
        %821 = vadd.xlane.f32.xlu0 %v820
        %v822 = vpop.xlane.xlu0 %821
        %v823 = vpack.c.bf16 %v819, %v819
        %v825 = vsel %vm767, %v823, 0
        %vm827 = vcmask 1043456
        %v829 = vsel %vm827, %v766, 0
        %831 = vmatprep.subr.bf16.mxu0 0
        %832 = vmatpush1.bf16.msra.mxu0 0
        %833 = vmatprep.subr.bf16.mxu0 0
        %834 = vmatpush1.bf16.msra.mxu0 0
        %835 = vmatprep.subr.bf16.mxu0 0
        %836 = vmatpush1.bf16.msra.mxu0 0
        %837 = vmatprep.subr.bf16.mxu0 0
        %838 = vmatpush1.bf16.msra.mxu0 0
        %839 = vmatprep.subr.bf16.mxu0 0
        %840 = vmatpush1.bf16.msra.mxu0 0
        %841 = vmatprep.subr.bf16.mxu0 0
        %842 = vmatpush1.bf16.msra.mxu0 0
        %843 = vmatprep.subr.bf16.mxu0 0
        %844 = vmatpush1.bf16.msra.mxu0 0
        %845 = vmatprep.subr.bf16.mxu0 0
        %846 = vmatpush1.bf16.msra.mxu0 %v829
        %847 = vmatprep.subr.bf16.mxu0 0
        %848 = vmatpush2.bf16.msra.mxu0 0
        %849 = vmatprep.subr.bf16.mxu0 0
        %850 = vmatpush2.bf16.msra.mxu0 0
        %851 = vmatprep.subr.bf16.mxu0 0
        %852 = vmatpush2.bf16.msra.mxu0 0
        %853 = vmatprep.subr.bf16.mxu0 0
        %854 = vmatpush2.bf16.msra.mxu0 0
        %855 = vmatprep.subr.bf16.mxu0 0
        %856 = vmatpush2.bf16.msra.mxu0 0
        %857 = vmatprep.subr.bf16.mxu0 0
        %858 = vmatpush2.bf16.msra.mxu0 0
        %859 = vmatprep.subr.bf16.mxu0 0
        %860 = vmatpush2.bf16.msra.mxu0 0
        %861 = vmatprep.subr.bf16.mxu0 0
        %862 = vmatpush2.bf16.msra.mxu0 0
        %863 = vmatprep.mubr.bf16.mxu0 0
        %864 = vmatmul.mubr.bf16.gmra.mxu0 %v825
        %v865 = vpop.f32.mrf.mxu0
        %v866 = vadd.f32 0.0, %v865
        %v867 = vpop.f32.mrf.mxu0
        %v868 = vpop.f32.mrf.mxu0
        %v869 = vpop.f32.mrf.mxu0
        %870 = vdwg.mxu0
        %v871 = vrcp.pop %v822
        %v872 = vmul.f32 %v866, %v871
        %v873 = vpack.c.bf16 %v872, %v872
        %vm874 = vcmask 60416
        %875 = vst.msk [vmem:[#allocation5] sm:$0xf] %vm874, %v873
        %v876 = vld [vmem:[#allocation2] sm:$0xf]
        %v877 = vld [vmem:[#allocation3] sm:$0xf]
        %v878 = vld [vmem:[#allocation4] sm:$0xf]
        %v880 = vunpack.c.l.b16 %v876
        %v881 = vpack.c.b16 %v880, %v880
        %882 = vrot.lane.b32.xlu0 %v881, 120
        %v883 = vpop.permute.xlu0 %882
        %v885 = vunpack.c.l.b16 %v877
        %v886 = vpack.c.b16 %v885, %v885
        %887 = vrot.lane.b32.xlu0 %v886, 120
        %v888 = vpop.permute.xlu0 %887
        %v890 = vsel %vm767, %v883, 0
        %v893 = vsel %vm767, %v888, 0
        %895 = vmatprep.subr.bf16.mxu0 0
        %896 = vmatpush1.bf16.xpose.msra.mxu0 0
        %897 = vmatprep.subr.bf16.mxu0 0
        %898 = vmatpush1.bf16.xpose.msra.mxu0 0
        %899 = vmatprep.subr.bf16.mxu0 0
        %900 = vmatpush1.bf16.xpose.msra.mxu0 0
        %901 = vmatprep.subr.bf16.mxu0 0
        %902 = vmatpush1.bf16.xpose.msra.mxu0 0
        %903 = vmatprep.subr.bf16.mxu0 0
        %904 = vmatpush1.bf16.xpose.msra.mxu0 0
        %905 = vmatprep.subr.bf16.mxu0 0
        %906 = vmatpush1.bf16.xpose.msra.mxu0 0
        %907 = vmatprep.subr.bf16.mxu0 0
        %908 = vmatpush1.bf16.xpose.msra.mxu0 0
        %909 = vmatprep.subr.bf16.mxu0 0
        %910 = vmatpush1.bf16.xpose.msra.mxu0 %v893
        %911 = vmatprep.subr.bf16.mxu0 0
        %912 = vmatpush2.bf16.xpose.msra.mxu0 0
        %913 = vmatprep.subr.bf16.mxu0 0
        %914 = vmatpush2.bf16.xpose.msra.mxu0 0
        %915 = vmatprep.subr.bf16.mxu0 0
        %916 = vmatpush2.bf16.xpose.msra.mxu0 0
        %917 = vmatprep.subr.bf16.mxu0 0
        %918 = vmatpush2.bf16.xpose.msra.mxu0 0
        %919 = vmatprep.subr.bf16.mxu0 0
        %920 = vmatpush2.bf16.xpose.msra.mxu0 0
        %921 = vmatprep.subr.bf16.mxu0 0
        %922 = vmatpush2.bf16.xpose.msra.mxu0 0
        %923 = vmatprep.subr.bf16.mxu0 0
        %924 = vmatpush2.bf16.xpose.msra.mxu0 0
        %925 = vmatprep.subr.bf16.mxu0 0
        %926 = vmatpush2.bf16.xpose.msra.mxu0 0
        %927 = vmatprep.mubr.bf16.mxu0 0
        %928 = vmatmul.mubr.bf16.gmra.mxu0 %v890
        %v929 = vpop.f32.mrf.mxu0
        %v930 = vadd.f32 0.0, %v929
        %v931 = vpop.f32.mrf.mxu0
        %v932 = vpop.f32.mrf.mxu0
        %v933 = vpop.f32.mrf.mxu0
        %934 = vdwg.mxu0
        %v935 = vsel %vm767, %v930, -inf
        %936 = vmax.xlane.f32.xlu0 %v935
        %v937 = vpop.xlane.xlu0 %936
        %v938 = vsub.f32 %v930, %v937
        %v939 = vmul.f32 %v938, 1.442695
        %v940 = vpow.pop %v939
        %v941 = vsel %vm767, %v940, 0.0
        %942 = vadd.xlane.f32.xlu0 %v941
        %v943 = vpop.xlane.xlu0 %942
        %v944 = vpack.c.bf16 %v940, %v940
        %v946 = vunpack.c.l.b16 %v878
        %v947 = vpack.c.b16 %v946, %v946
        %948 = vrot.lane.b32.xlu0 %v947, 120
        %v949 = vpop.permute.xlu0 %948
        %v951 = vsel %vm767, %v944, 0
        %v954 = vsel %vm827, %v949, 0
        %956 = vmatprep.subr.bf16.mxu0 0
        %957 = vmatpush1.bf16.msra.mxu0 0
        %958 = vmatprep.subr.bf16.mxu0 0
        %959 = vmatpush1.bf16.msra.mxu0 0
        %960 = vmatprep.subr.bf16.mxu0 0
        %961 = vmatpush1.bf16.msra.mxu0 0
        %962 = vmatprep.subr.bf16.mxu0 0
        %963 = vmatpush1.bf16.msra.mxu0 0
        %964 = vmatprep.subr.bf16.mxu0 0
        %965 = vmatpush1.bf16.msra.mxu0 0
        %966 = vmatprep.subr.bf16.mxu0 0
        %967 = vmatpush1.bf16.msra.mxu0 0
        %968 = vmatprep.subr.bf16.mxu0 0
        %969 = vmatpush1.bf16.msra.mxu0 0
        %970 = vmatprep.subr.bf16.mxu0 0
        %971 = vmatpush1.bf16.msra.mxu0 %v954
        %972 = vmatprep.subr.bf16.mxu0 0
        %973 = vmatpush2.bf16.msra.mxu0 0
        %974 = vmatprep.subr.bf16.mxu0 0
        %975 = vmatpush2.bf16.msra.mxu0 0
        %976 = vmatprep.subr.bf16.mxu0 0
        %977 = vmatpush2.bf16.msra.mxu0 0
        %978 = vmatprep.subr.bf16.mxu0 0
        %979 = vmatpush2.bf16.msra.mxu0 0
        %980 = vmatprep.subr.bf16.mxu0 0
        %981 = vmatpush2.bf16.msra.mxu0 0
        %982 = vmatprep.subr.bf16.mxu0 0
        %983 = vmatpush2.bf16.msra.mxu0 0
        %984 = vmatprep.subr.bf16.mxu0 0
        %985 = vmatpush2.bf16.msra.mxu0 0
        %986 = vmatprep.subr.bf16.mxu0 0
        %987 = vmatpush2.bf16.msra.mxu0 0
        %988 = vmatprep.mubr.bf16.mxu0 0
        %989 = vmatmul.mubr.bf16.gmra.mxu0 %v951
        %v990 = vpop.f32.mrf.mxu0
        %v991 = vadd.f32 0.0, %v990
        %v992 = vpop.f32.mrf.mxu0
        %v993 = vpop.f32.mrf.mxu0
        %v994 = vpop.f32.mrf.mxu0
        %995 = vdwg.mxu0
        %v996 = vrcp.pop %v943
        %v997 = vmul.f32 %v991, %v996
        %v998 = vpack.c.bf16 %v997, %v997
        %v1000 = vunpack.c.l.b16 %v998
        %v1001 = vpack.c.b16 %v1000, %v1000
        %1002 = vrot.lane.b32.xlu0 %v1001, 8
        %v1003 = vpop.permute.xlu0 %1002
        %vm1005 = vcmask 126016
        %1006 = vst.msk [vmem:[#allocation5] sm:$0xf] %vm1005, %v1003
        %v1007 = vld [vmem:[#allocation2] sm:$0xf]
        %v1008 = vld [vmem:[#allocation3] sm:$0xf]
        %v1009 = vld [vmem:[#allocation4] sm:$0xf]
        %v1011 = vunpack.c.l.b16 %v1007
        %v1012 = vpack.c.b16 %v1011, %v1011
        %1013 = vrot.lane.b32.xlu0 %v1012, 112
        %v1014 = vpop.permute.xlu0 %1013
        %v1016 = vunpack.c.l.b16 %v1008
        %v1017 = vpack.c.b16 %v1016, %v1016
        %1018 = vrot.lane.b32.xlu0 %v1017, 112
        %v1019 = vpop.permute.xlu0 %1018
        %v1021 = vsel %vm767, %v1014, 0
        %v1024 = vsel %vm767, %v1019, 0
        %1026 = vmatprep.subr.bf16.mxu0 0
        %1027 = vmatpush1.bf16.xpose.msra.mxu0 0
        %1028 = vmatprep.subr.bf16.mxu0 0
        %1029 = vmatpush1.bf16.xpose.msra.mxu0 0
        %1030 = vmatprep.subr.bf16.mxu0 0
        %1031 = vmatpush1.bf16.xpose.msra.mxu0 0
        %1032 = vmatprep.subr.bf16.mxu0 0
        %1033 = vmatpush1.bf16.xpose.msra.mxu0 0
        %1034 = vmatprep.subr.bf16.mxu0 0
        %1035 = vmatpush1.bf16.xpose.msra.mxu0 0
        %1036 = vmatprep.subr.bf16.mxu0 0
        %1037 = vmatpush1.bf16.xpose.msra.mxu0 0
        %1038 = vmatprep.subr.bf16.mxu0 0
        %1039 = vmatpush1.bf16.xpose.msra.mxu0 0
        %1040 = vmatprep.subr.bf16.mxu0 0
        %1041 = vmatpush1.bf16.xpose.msra.mxu0 %v1024
        %1042 = vmatprep.subr.bf16.mxu0 0
        %1043 = vmatpush2.bf16.xpose.msra.mxu0 0
        %1044 = vmatprep.subr.bf16.mxu0 0
        %1045 = vmatpush2.bf16.xpose.msra.mxu0 0
        %1046 = vmatprep.subr.bf16.mxu0 0
        %1047 = vmatpush2.bf16.xpose.msra.mxu0 0
        %1048 = vmatprep.subr.bf16.mxu0 0
        %1049 = vmatpush2.bf16.xpose.msra.mxu0 0
        %1050 = vmatprep.subr.bf16.mxu0 0
        %1051 = vmatpush2.bf16.xpose.msra.mxu0 0
        %1052 = vmatprep.subr.bf16.mxu0 0
        %1053 = vmatpush2.bf16.xpose.msra.mxu0 0
        %1054 = vmatprep.subr.bf16.mxu0 0
        %1055 = vmatpush2.bf16.xpose.msra.mxu0 0
        %1056 = vmatprep.subr.bf16.mxu0 0
        %1057 = vmatpush2.bf16.xpose.msra.mxu0 0
        %1058 = vmatprep.mubr.bf16.mxu0 0
        %1059 = vmatmul.mubr.bf16.gmra.mxu0 %v1021
        %v1060 = vpop.f32.mrf.mxu0
        %v1061 = vadd.f32 0.0, %v1060
        %v1062 = vpop.f32.mrf.mxu0
        %v1063 = vpop.f32.mrf.mxu0
        %v1064 = vpop.f32.mrf.mxu0
        %1065 = vdwg.mxu0
        %v1066 = vsel %vm767, %v1061, -inf
        %1067 = vmax.xlane.f32.xlu0 %v1066
        %v1068 = vpop.xlane.xlu0 %1067
        %v1069 = vsub.f32 %v1061, %v1068
        %v1070 = vmul.f32 %v1069, 1.442695
        %v1071 = vpow.pop %v1070
        %v1072 = vsel %vm767, %v1071, 0.0
        %1073 = vadd.xlane.f32.xlu0 %v1072
        %v1074 = vpop.xlane.xlu0 %1073
        %v1075 = vpack.c.bf16 %v1071, %v1071
        %v1077 = vunpack.c.l.b16 %v1009
        %v1078 = vpack.c.b16 %v1077, %v1077
        %1079 = vrot.lane.b32.xlu0 %v1078, 112
        %v1080 = vpop.permute.xlu0 %1079
        %v1082 = vsel %vm767, %v1075, 0
        %v1085 = vsel %vm827, %v1080, 0
        %1087 = vmatprep.subr.bf16.mxu0 0
        %1088 = vmatpush1.bf16.msra.mxu0 0
        %1089 = vmatprep.subr.bf16.mxu0 0
        %1090 = vmatpush1.bf16.msra.mxu0 0
        %1091 = vmatprep.subr.bf16.mxu0 0
        %1092 = vmatpush1.bf16.msra.mxu0 0
        %1093 = vmatprep.subr.bf16.mxu0 0
        %1094 = vmatpush1.bf16.msra.mxu0 0
        %1095 = vmatprep.subr.bf16.mxu0 0
        %1096 = vmatpush1.bf16.msra.mxu0 0
        %1097 = vmatprep.subr.bf16.mxu0 0
        %1098 = vmatpush1.bf16.msra.mxu0 0
        %1099 = vmatprep.subr.bf16.mxu0 0
        %1100 = vmatpush1.bf16.msra.mxu0 0
        %1101 = vmatprep.subr.bf16.mxu0 0
        %1102 = vmatpush1.bf16.msra.mxu0 %v1085
        %1103 = vmatprep.subr.bf16.mxu0 0
        %1104 = vmatpush2.bf16.msra.mxu0 0
        %1105 = vmatprep.subr.bf16.mxu0 0
        %1106 = vmatpush2.bf16.msra.mxu0 0
        %1107 = vmatprep.subr.bf16.mxu0 0
        %1108 = vmatpush2.bf16.msra.mxu0 0
        %1109 = vmatprep.subr.bf16.mxu0 0
        %1110 = vmatpush2.bf16.msra.mxu0 0
        %1111 = vmatprep.subr.bf16.mxu0 0
        %1112 = vmatpush2.bf16.msra.mxu0 0
        %1113 = vmatprep.subr.bf16.mxu0 0
        %1114 = vmatpush2.bf16.msra.mxu0 0
        %1115 = vmatprep.subr.bf16.mxu0 0
        %1116 = vmatpush2.bf16.msra.mxu0 0
        %1117 = vmatprep.subr.bf16.mxu0 0
        %1118 = vmatpush2.bf16.msra.mxu0 0
        %1119 = vmatprep.mubr.bf16.mxu0 0
        %1120 = vmatmul.mubr.bf16.gmra.mxu0 %v1082
        %v1121 = vpop.f32.mrf.mxu0
        %v1122 = vadd.f32 0.0, %v1121
        %v1123 = vpop.f32.mrf.mxu0
        %v1124 = vpop.f32.mrf.mxu0
        %v1125 = vpop.f32.mrf.mxu0
        %1126 = vdwg.mxu0
        %v1127 = vrcp.pop %v1074
        %v1128 = vmul.f32 %v1122, %v1127
        %v1129 = vpack.c.bf16 %v1128, %v1128
        %v1131 = vunpack.c.l.b16 %v1129
        %v1132 = vpack.c.b16 %v1131, %v1131
        %1133 = vrot.lane.b32.xlu0 %v1132, 16
        %v1134 = vpop.permute.xlu0 %1133
        %vm1136 = vcmask 191616
        %1137 = vst.msk [vmem:[#allocation5] sm:$0xf] %vm1136, %v1134
        %v1138 = vld [vmem:[#allocation2] sm:$0xf]
        %v1139 = vld [vmem:[#allocation3] sm:$0xf]
        %v1140 = vld [vmem:[#allocation4] sm:$0xf]
        %v1142 = vunpack.c.l.b16 %v1138
        %v1143 = vpack.c.b16 %v1142, %v1142
        %1144 = vrot.lane.b32.xlu0 %v1143, 104
        %v1145 = vpop.permute.xlu0 %1144
        %v1147 = vunpack.c.l.b16 %v1139
        %v1148 = vpack.c.b16 %v1147, %v1147
        %1149 = vrot.lane.b32.xlu0 %v1148, 104
        %v1150 = vpop.permute.xlu0 %1149
        %v1152 = vsel %vm767, %v1145, 0
        %v1155 = vsel %vm767, %v1150, 0
        %1157 = vmatprep.subr.bf16.mxu0 0
        %1158 = vmatpush1.bf16.xpose.msra.mxu0 0
        %1159 = vmatprep.subr.bf16.mxu0 0
        %1160 = vmatpush1.bf16.xpose.msra.mxu0 0
        %1161 = vmatprep.subr.bf16.mxu0 0
        %1162 = vmatpush1.bf16.xpose.msra.mxu0 0
        %1163 = vmatprep.subr.bf16.mxu0 0
        %1164 = vmatpush1.bf16.xpose.msra.mxu0 0
        %1165 = vmatprep.subr.bf16.mxu0 0
        %1166 = vmatpush1.bf16.xpose.msra.mxu0 0
        %1167 = vmatprep.subr.bf16.mxu0 0
        %1168 = vmatpush1.bf16.xpose.msra.mxu0 0
        %1169 = vmatprep.subr.bf16.mxu0 0
        %1170 = vmatpush1.bf16.xpose.msra.mxu0 0
        %1171 = vmatprep.subr.bf16.mxu0 0
        %1172 = vmatpush1.bf16.xpose.msra.mxu0 %v1155
        %1173 = vmatprep.subr.bf16.mxu0 0
        %1174 = vmatpush2.bf16.xpose.msra.mxu0 0
        %1175 = vmatprep.subr.bf16.mxu0 0
        %1176 = vmatpush2.bf16.xpose.msra.mxu0 0
        %1177 = vmatprep.subr.bf16.mxu0 0
        %1178 = vmatpush2.bf16.xpose.msra.mxu0 0
        %1179 = vmatprep.subr.bf16.mxu0 0
        %1180 = vmatpush2.bf16.xpose.msra.mxu0 0
        %1181 = vmatprep.subr.bf16.mxu0 0
        %1182 = vmatpush2.bf16.xpose.msra.mxu0 0
        %1183 = vmatprep.subr.bf16.mxu0 0
        %1184 = vmatpush2.bf16.xpose.msra.mxu0 0
        %1185 = vmatprep.subr.bf16.mxu0 0
        %1186 = vmatpush2.bf16.xpose.msra.mxu0 0
        %1187 = vmatprep.subr.bf16.mxu0 0
        %1188 = vmatpush2.bf16.xpose.msra.mxu0 0
        %1189 = vmatprep.mubr.bf16.mxu0 0
        %1190 = vmatmul.mubr.bf16.gmra.mxu0 %v1152
        %v1191 = vpop.f32.mrf.mxu0
        %v1192 = vadd.f32 0.0, %v1191
        %v1193 = vpop.f32.mrf.mxu0
        %v1194 = vpop.f32.mrf.mxu0
        %v1195 = vpop.f32.mrf.mxu0
        %1196 = vdwg.mxu0
        %v1197 = vsel %vm767, %v1192, -inf
        %1198 = vmax.xlane.f32.xlu0 %v1197
        %v1199 = vpop.xlane.xlu0 %1198
        %v1200 = vsub.f32 %v1192, %v1199
        %v1201 = vmul.f32 %v1200, 1.442695
        %v1202 = vpow.pop %v1201
        %v1203 = vsel %vm767, %v1202, 0.0
        %1204 = vadd.xlane.f32.xlu0 %v1203
        %v1205 = vpop.xlane.xlu0 %1204
        %v1206 = vpack.c.bf16 %v1202, %v1202
        %v1208 = vunpack.c.l.b16 %v1140
        %v1209 = vpack.c.b16 %v1208, %v1208
        %1210 = vrot.lane.b32.xlu0 %v1209, 104
        %v1211 = vpop.permute.xlu0 %1210
        %v1213 = vsel %vm767, %v1206, 0
        %v1216 = vsel %vm827, %v1211, 0
        %1218 = vmatprep.subr.bf16.mxu0 0
        %1219 = vmatpush1.bf16.msra.mxu0 0
        %1220 = vmatprep.subr.bf16.mxu0 0
        %1221 = vmatpush1.bf16.msra.mxu0 0
        %1222 = vmatprep.subr.bf16.mxu0 0
        %1223 = vmatpush1.bf16.msra.mxu0 0
        %1224 = vmatprep.subr.bf16.mxu0 0
        %1225 = vmatpush1.bf16.msra.mxu0 0
        %1226 = vmatprep.subr.bf16.mxu0 0
        %1227 = vmatpush1.bf16.msra.mxu0 0
        %1228 = vmatprep.subr.bf16.mxu0 0
        %1229 = vmatpush1.bf16.msra.mxu0 0
        %1230 = vmatprep.subr.bf16.mxu0 0
        %1231 = vmatpush1.bf16.msra.mxu0 0
        %1232 = vmatprep.subr.bf16.mxu0 0
        %1233 = vmatpush1.bf16.msra.mxu0 %v1216
        %1234 = vmatprep.subr.bf16.mxu0 0
        %1235 = vmatpush2.bf16.msra.mxu0 0
        %1236 = vmatprep.subr.bf16.mxu0 0
        %1237 = vmatpush2.bf16.msra.mxu0 0
        %1238 = vmatprep.subr.bf16.mxu0 0
        %1239 = vmatpush2.bf16.msra.mxu0 0
        %1240 = vmatprep.subr.bf16.mxu0 0
        %1241 = vmatpush2.bf16.msra.mxu0 0
        %1242 = vmatprep.subr.bf16.mxu0 0
        %1243 = vmatpush2.bf16.msra.mxu0 0
        %1244 = vmatprep.subr.bf16.mxu0 0
        %1245 = vmatpush2.bf16.msra.mxu0 0
        %1246 = vmatprep.subr.bf16.mxu0 0
        %1247 = vmatpush2.bf16.msra.mxu0 0
        %1248 = vmatprep.subr.bf16.mxu0 0
        %1249 = vmatpush2.bf16.msra.mxu0 0
        %1250 = vmatprep.mubr.bf16.mxu0 0
        %1251 = vmatmul.mubr.bf16.gmra.mxu0 %v1213
        %v1252 = vpop.f32.mrf.mxu0
        %v1253 = vadd.f32 0.0, %v1252
        %v1254 = vpop.f32.mrf.mxu0
        %v1255 = vpop.f32.mrf.mxu0
        %v1256 = vpop.f32.mrf.mxu0
        %1257 = vdwg.mxu0
        %v1258 = vrcp.pop %v1205
        %v1259 = vmul.f32 %v1253, %v1258
        %v1260 = vpack.c.bf16 %v1259, %v1259
        %v1262 = vunpack.c.l.b16 %v1260
        %v1263 = vpack.c.b16 %v1262, %v1262
        %1264 = vrot.lane.b32.xlu0 %v1263, 24
        %v1265 = vpop.permute.xlu0 %1264
        %vm1267 = vcmask 257216
        %1268 = vst.msk [vmem:[#allocation5] sm:$0xf] %vm1267, %v1265
        %v1269 = vld [vmem:[#allocation5] sm:$0xf]
        %v1270 = vld [vmem:[%s9] sm:$0xf]
        %v1271 = vld [vmem:[%s9 + $0x4] sm:$0xf]
        %v1272 = vld [vmem:[%s9 + $0x8] sm:$0xf]
        %v1273 = vld [vmem:[%s9 + $0xc] sm:$0xf]
        %v1274 = vld [vmem:[%s10] sm:$0x1]
        %v1276 = vlaneseq
        %v1277 = vshrl.u32 %v1276, 7
        %v1278 = vsub.s32 0, %v1277
        %v1279 = vrot.slane %v1274, %v1278
        %v1285 = vunpack.c.l.b16 %v1270
        %v1286 = vunpack.c.l.b16 %v1271
        %v1287 = vunpack.c.l.b16 %v1272
        %v1288 = vunpack.c.l.b16 %v1273
        %v1289 = vpack.c.b16 %v1286, %v1285
        %v1290 = vpack.c.b16 %v1288, %v1287
        %v1294 = vsel %vm579, %v1269, 0
        %1296 = vmatprep.subr.bf16.mxu0 0
        %1297 = vmatpush1.bf16.msra.mxu0 0
        %1298 = vmatprep.subr.bf16.mxu0 0
        %1299 = vmatpush1.bf16.msra.mxu0 0
        %1300 = vmatprep.subr.bf16.mxu0 0
        %1301 = vmatpush1.bf16.msra.mxu0 0
        %1302 = vmatprep.subr.bf16.mxu0 0
        %1303 = vmatpush1.bf16.msra.mxu0 0
        %1304 = vmatprep.subr.bf16.mxu0 0
        %1305 = vmatpush1.bf16.msra.mxu0 0
        %1306 = vmatprep.subr.bf16.mxu0 0
        %1307 = vmatpush1.bf16.msra.mxu0 0
        %1308 = vmatprep.subr.bf16.mxu0 0
        %1309 = vmatpush1.bf16.msra.mxu0 %v1290
        %1310 = vmatprep.subr.bf16.mxu0 0
        %1311 = vmatpush1.bf16.msra.mxu0 %v1289
        %1312 = vmatprep.subr.bf16.mxu0 0
        %1313 = vmatpush2.bf16.msra.mxu0 0
        %1314 = vmatprep.subr.bf16.mxu0 0
        %1315 = vmatpush2.bf16.msra.mxu0 0
        %1316 = vmatprep.subr.bf16.mxu0 0
        %1317 = vmatpush2.bf16.msra.mxu0 0
        %1318 = vmatprep.subr.bf16.mxu0 0
        %1319 = vmatpush2.bf16.msra.mxu0 0
        %1320 = vmatprep.subr.bf16.mxu0 0
        %1321 = vmatpush2.bf16.msra.mxu0 0
        %1322 = vmatprep.subr.bf16.mxu0 0
        %1323 = vmatpush2.bf16.msra.mxu0 0
        %1324 = vmatprep.subr.bf16.mxu0 0
        %1325 = vmatpush2.bf16.msra.mxu0 0
        %1326 = vmatprep.subr.bf16.mxu0 0
        %1327 = vmatpush2.bf16.msra.mxu0 0
        %1328 = vmatprep.mubr.bf16.mxu0 0
        %1329 = vmatmul.mubr.bf16.gmra.mxu0 %v1294
        %v1330 = vpop.f32.mrf.mxu0
        %v1331 = vadd.f32 %v1279, %v1330
        %v1332 = vpop.f32.mrf.mxu0
        %v1333 = vpop.f32.mrf.mxu0
        %v1334 = vpop.f32.mrf.mxu0
        %1335 = vdwg.mxu0
        %1336 = vst.msk [vmem:[%s553] sm:$0xff] %vm579, %v1331
        %s1337 = sand.u32 %s288, 1
        %s1338 = scalar_lea.sflag [#allocation8], %s1337
        %s1339 = sand.u32 %s288, 1
        %s1340 = smul.addr %s1339, 8
        %s1341 = scalar_lea.vmem [#allocation21], %s1340
        // Predicated region
        $region101: #{tpu_custom_call.1} parent=63 // pred_check
          %p1342 = pneg %p298
        $region102: #{tpu_custom_call.1} parent=63 // pred_check_branch
          %1344 = sbr.rel (%p1342) target = $region104
        $region103: #{tpu_custom_call.1} parent=63 // pred_region
          %s1346 = ssub.s32 128, 128
          %1347 = vsyncadd %s1338, %s1346
          %s1348 = smul.addr %s34, 128
          %s1349 = scalar_lea.hbm %s11, %s1348
          %s1351 = sshll.u32 %s1341, 4
          %s1352 = int_to_ptr.vmem [resolvable:$true] %s1351
          %1354 = dma.vmem_to_hbm [thread:$0]  %s1352, 128, %s1349, %s1338
        $region104: #{tpu_custom_call.1} parent=63 // pred_fallthru
          _
      $region64: #{tpu_custom_call.1} parent=5 // pred_fallthru
        _
      %p1355 = scmp.le.s32.totalorder 2, %s29
      // Predicated region
      $region105: #{tpu_custom_call.1} parent=5 // pred_check
        %p1356 = pneg %p1355
      $region106: #{tpu_custom_call.1} parent=5 // pred_check_branch
        %1358 = sbr.rel (%p1356) target = $region108
      $region107: #{tpu_custom_call.1} parent=5 // pred_region
        %s1359 = ssub.s32 %s29, 2
        // Predicated region
        $region109: #{tpu_custom_call.1} parent=107 // pred_check
          %p1360 = pneg %p304
        $region110: #{tpu_custom_call.1} parent=107 // pred_check_branch
          %1362 = sbr.rel (%p1360) target = $region112
        $region111: #{tpu_custom_call.1} parent=107 // pred_region
          %s1363 = sand.u32 %s289, 1
          %s1364 = scalar_lea.sflag [#allocation8], %s1363
          %s1365 = sand.u32 %s289, 1
          %s1366 = smul.addr %s1365, 8
          %s1367 = scalar_lea.vmem [#allocation21], %s1366
          %1368 = dma.done %s1364, 128
        $region112: #{tpu_custom_call.1} parent=107 // pred_fallthru
          _
      $region108: #{tpu_custom_call.1} parent=5 // pred_fallthru
        _
    $region6: #{tpu_custom_call.1} parent=1 // loop_footer
      %s33 = sadd.s32 1, %s29
    $region7: #{tpu_custom_call.1} parent=1 // loop_footer_branch
      %28 = sbr.rel target = $region3
    $region8: #{tpu_custom_call.1} parent=1 // loop_exit
      _
    %1369 = vsyncpa [#allocation7], 1
    %s1370 = scalar_lea.sflag [#allocation7], 1
    %1371 = vsyncpa %s1370, 1
    %1372 = vsyncpa [#allocation10], 1
    %s1373 = scalar_lea.sflag [#allocation10], 1
    %1374 = vsyncpa %s1373, 1
    %1375 = vsyncpa [#allocation13], 1
    %1376 = vsyncpa [#allocation16], 1
    %1377 = vsyncpa [#allocation19], 1
    %1378 = vsyncpa [#allocation8], 1
    %s1379 = scalar_lea.sflag [#allocation8], 1
    %1380 = vsyncpa %s1379, 1

</llo_original>
